<compile_context>
chip_gen: v6e
topology: v6e:2x2x1
jax: 0.10.0
libtpu: 0.0.40
codegen_flags: <defaults>
</compile_context>

<pallas_src>
import math
import functools

import jax
import jax.numpy as jnp
from jax import lax
from jax.experimental import pallas as pl
from jax.experimental.pallas import tpu as pltpu


def _safe_pivot(p, tiny=1e-30):
    # Sign-preserving clamp so an underflowing pivot can't produce inf/nan.
    return jnp.where(jnp.abs(p) < tiny, jnp.where(p < 0, -tiny, tiny), p)


def _augment(A):
    """[A | I] of shape (TB, n, 2n)."""
    TB, n, _ = A.shape
    eye = (lax.broadcasted_iota(jnp.int32, (1, n, n), 1) ==
           lax.broadcasted_iota(jnp.int32, (1, n, n), 2)).astype(A.dtype)
    return jnp.concatenate([A, jnp.broadcast_to(eye, (TB, n, n))], axis=-1)


def _gj_inverse_unrolled(A):
    """Batched Gauss-Jordan inverse of A: (TB, n, n), fully unrolled (static k).

    Works on the augmented matrix [A | I] so each step is a single static row slice,
    a static column slice and ONE rank-1 update over 2n lanes. The 'col_mult[k] =
    pivot - 1' trick makes the same update eliminate column k and normalize row k.
    """
    TB, n, _ = A.shape
    ri = lax.broadcasted_iota(jnp.int32, (1, n, 1), 1)
    M = _augment(A)                                # (TB, n, 2n)
    for k in range(n):                             # static unroll: full ILP visibility
        row = M[:, k:k + 1, :]                     # (TB, 1, 2n)  static sublane slice
        pivot = _safe_pivot(row[:, :, k:k + 1])    # (TB, 1, 1)   static lane slice
        row = row * (1.0 / pivot)
        # column k (A-part); at row k substitute (pivot - 1) so row k ends up normalized.
        col_mult = jnp.where(ri == k, pivot - 1.0, M[:, :, k:k + 1])   # (TB, n, 1)
        M = M - col_mult * row
    return M[:, :, n:]                             # right half = A^{-1}


def _gj_inverse_fori(A):
    """Fallback for large n: rolled fori_loop on [A | I] using masked reductions."""
    TB, n, _ = A.shape
    ri = lax.broadcasted_iota(jnp.int32, (1, n, 1), 1)
    ci = lax.broadcasted_iota(jnp.int32, (1, 1, 2 * n), 2)
    M0 = _augment(A)

    def body(k, M):
        row_is_k = ri == k
        col_is_k = ci == k                                   # k < n: selects the A-part column
        row = jnp.sum(jnp.where(row_is_k, M, 0.0), axis=1, keepdims=True)     # (TB,1,2n)
        pivot = _safe_pivot(jnp.sum(jnp.where(col_is_k, row, 0.0), axis=2, keepdims=True))
        row = row * (1.0 / pivot)
        colk = jnp.sum(jnp.where(col_is_k, M, 0.0), axis=2, keepdims=True)    # (TB,n,1)
        col_mult = jnp.where(row_is_k, pivot - 1.0, colk)
        return M - col_mult * row

    M = lax.fori_loop(0, n, body, M0)
    return M[:, :, n:]


def _gj_inverse(A, unroll_threshold=32):
    n = A.shape[-1]
    return _gj_inverse_unrolled(A) if n <= unroll_threshold else _gj_inverse_fori(A)


def tree_attention_kernel(x_ref, wqkv_ref, o_ref, *, scale, clamp, eps):
    # x_ref block: (TB, S, D) for TB batch elements of the current grid step.
    TB, S, D = x_ref.shape
    x = x_ref[...]                                           # (TB, S, D)

    # Fused q/k/v projection: one (TB*S, D) @ (D, 3D) matmul on the MXU.
    qkv = jnp.dot(x.reshape(TB * S, D), wqkv_ref[...],
                  preferred_element_type=jnp.float32)        # (TB*S, 3D)
    q = qkv[:, 0 * D:1 * D].reshape(TB, S, D)
    k = qkv[:, 1 * D:2 * D].reshape(TB, S, D)
    v = qkv[:, 2 * D:3 * D].reshape(TB, S, D)

    # score[b, i, j] = <q_i, k_j> * scale, clamped.
    score = jnp.einsum('bid,bjd->bij', q, k,
                       preferred_element_type=jnp.float32) * scale
    score = jnp.clip(score, -clamp, clamp)

    ri = lax.broadcasted_iota(jnp.int32, (1, S, S), 1)
    ci = lax.broadcasted_iota(jnp.int32, (1, S, S), 2)
    on_diag = ri == ci
    eye = on_diag.astype(jnp.float32)

    # --- Matrix-Tree marginals (lengths=None path) ---
    exp_score = jnp.exp(score)                                # (TB, S, S)
    lap_off = jnp.where(on_diag, 0.0, exp_score + eps)        # masked_fill(diag, 0)
    col_sums = jnp.sum(lap_off, axis=1, keepdims=True)        # (TB, 1, S): lap.sum(0)
    lap = eye * col_sums - lap_off                            # -lap + diag(lap.sum(0))
    # Diagonal of exp(score): mask once, reduce along both axes (row/col orientation).
    exp_diag_masked = jnp.where(on_diag, exp_score, 0.0)
    diag_row = jnp.sum(exp_diag_masked, axis=1, keepdims=True)   # (TB,1,S): exp(score[j,j])
    diag_col = jnp.sum(exp_diag_masked, axis=2, keepdims=True)   # (TB,S,1): exp(score[i,i])
    # lap[0, :] = exp(score.diag())
    lap = jnp.where(ri == 0, diag_row, lap)

    inv = _gj_inverse(lap)                                    # (TB, S, S)

    # Build attn already transposed: attn_t[b, j, i] = attn[b, i, j],
    # so the final contraction is a plain batched matmul attn_t @ v.
    exp_score_t = jnp.transpose(exp_score, (0, 2, 1))
    inv_diag = jnp.sum(jnp.where(on_diag, inv, 0.0), axis=2, keepdims=True)    # (TB,S,1): inv[j,j]

    term1_t = jnp.where(ri == 0, 0.0, exp_score_t * inv_diag)   # term1[:, 0] = 0  -> row 0 of attn_t
    term2_t = jnp.where(ci == 0, 0.0, exp_score_t * inv)        # term2[0]   = 0  -> col 0 of attn_t
    roots = diag_col * inv[:, :, 0:1]                           # (TB,S,1): exp(score[i,i]) * inv[i,0]
    attn_t = term1_t - term2_t + eye * roots

    # out[b, j, d] = sum_i attn[b, i, j] * v[b, i, d]  ==  bmm(attn.T, v)
    out = jnp.einsum('bji,bid->bjd', attn_t, v, preferred_element_type=jnp.float32)
    o_ref[...] = out.astype(o_ref.dtype)


def _pick_tb(B, S, D, vmem_budget_bytes=8 * 1024 * 1024):
    """Largest divisor of B whose per-step f32 working set fits a conservative (v7x-safe) budget."""
    # x/out (double-buffered) + qkv + ~14 (S,S)-sized temps (incl. the (S,2S) augmented matrix).
    per_elem = 4 * (4 * S * D + 3 * S * D + 14 * S * S)
    cap = max(1, vmem_budget_bytes // max(per_elem, 1))
    cap = min(cap, B, 256)
    tb = 1
    for d in range(1, cap + 1):
        if B % d == 0:
            tb = d
    return tb


def tree_attention(x_sbd, wq, wk, wv, *, clamp_thres=15.0, eps=1e-5, tb=None):
    """x_sbd: (s_len, batch, dim); wq/wk/wv: (dim, dim) nn.Linear weights (out, in)."""
    # TODO(synk): ragged `lengths` support (per-batch lx < s_len) is not implemented; lengths=None path only.
    S, B, D = x_sbd.shape
    # TODO(synk): if the producer can emit (B, S, D) directly this transpose (one extra HBM pass) goes away.
    x = jnp.transpose(x_sbd, (1, 0, 2)).astype(jnp.float32)           # (B, S, D)
    scale = math.sqrt(1.0 / D)
    # nn.Linear computes x @ W.T; pre-transpose and fuse the three weights into one (D, 3D) operand.
    wqkv = jnp.concatenate([jnp.asarray(wq, jnp.float32).T,
                            jnp.asarray(wk, jnp.float32).T,
                            jnp.asarray(wv, jnp.float32).T], axis=1)  # (D, 3D)

    TB = _pick_tb(B, S, D) if tb is None else tb
    assert B % TB == 0, f"batch {B} must be divisible by tile batch {TB}"

    kernel = functools.partial(tree_attention_kernel, scale=scale,
                               clamp=float(clamp_thres), eps=float(eps))
    out = pl.pallas_call(
        kernel,
        out_shape=jax.ShapeDtypeStruct((B, S, D), jnp.float32),
        grid_spec=pltpu.PrefetchScalarGridSpec(
            num_scalar_prefetch=0,
            grid=(B // TB,),
            in_specs=[
                pl.BlockSpec((TB, S, D), lambda b: (b, 0, 0)),
                pl.BlockSpec((D, 3 * D), lambda b: (0, 0)),
            ],
            out_specs=pl.BlockSpec((TB, S, D), lambda b: (b, 0, 0)),
        ),
        compiler_params=pltpu.CompilerParams(
            dimension_semantics=("parallel",),        # lets v7x's 2 TCs split the batch grid
            vmem_limit_bytes=32 * 1024 * 1024,        # >= default on all gens, safe on v7x (64 MiB phys)
        ),
    )(x, wqkv)
    return out                                                        # (batch, s_len, dim)


def _reference(x_sbd, wq, wk, wv, clamp_thres=15.0, eps=1e-5):
    """Pure-JAX reference mirroring the PyTorch module (lengths=None)."""
    S, B, D = x_sbd.shape
    x = jnp.transpose(x_sbd, (1, 0, 2))
    q = x @ wq.T
    k = x @ wk.T
    v = x @ wv.T
    scale = math.sqrt(1.0 / D)
    score = jnp.einsum('bid,bjd->bij', q, k) * scale
    score = jnp.clip(score, -clamp_thres, clamp_thres)
    outs = []
    eye = jnp.eye(S, dtype=jnp.float32)
    for b in range(B):
        s = score[b]
        lap_off = (jnp.exp(s) + eps) * (1.0 - eye)
        lap = -lap_off + jnp.diag(lap_off.sum(0))
        lap = lap.at[0].set(jnp.exp(jnp.diag(s)))
        inv = jnp.linalg.inv(lap)
        factor = jnp.broadcast_to(jnp.diag(inv)[None, :], (S, S))
        term1 = (jnp.exp(s) * factor).at[:, 0].set(0.0)
        term2 = (jnp.exp(s) * inv.T).at[0].set(0.0)
        attn = term1 - term2 + jnp.diag(jnp.exp(jnp.diag(s)) * inv.T[0])
        outs.append(attn.T @ v[b])
    return jnp.stack(outs)


if __name__ == "__main__":
    key = jax.random.PRNGKey(0)
    S, B, D = 8, 2, 32
    kx, kq, kk, kv = jax.random.split(key, 4)
    x = jax.random.normal(kx, (S, B, D), dtype=jnp.float32)
    bound = 1.0 / math.sqrt(D)  # nn.Linear default init range
    wq = jax.random.uniform(kq, (D, D), jnp.float32, -bound, bound)
    wk = jax.random.uniform(kk, (D, D), jnp.float32, -bound, bound)
    wv = jax.random.uniform(kv, (D, D), jnp.float32, -bound, bound)

    out = tree_attention(x, wq, wk, wv)
    out = jax.block_until_ready(out)

    ref = _reference(x, wq, wk, wv)
    assert out.shape == (B, S, D)
    assert bool(jnp.all(jnp.isfinite(out)))
    max_err = float(jnp.max(jnp.abs(out - ref)))
    assert jnp.allclose(out, ref, rtol=1e-2, atol=1e-3), f"max abs err {max_err}"
    print("KERNEL_OK")
</pallas_src>

<mosaic_0001>
module attributes {stable_mosaic.version = 11 : i64} {
  func.func @tree_attention_kernel(%arg0: i32, %arg1: memref<2x8x32xf32, #tpu.memory_space<vmem>>, %arg2: memref<32x96xf32, #tpu.memory_space<vmem>>, %arg3: memref<2x8x32xf32, #tpu.memory_space<vmem>>) attributes {dimension_semantics = [#tpu.dimension_semantics<parallel>], iteration_bounds = array<i64: 1>, scalar_prefetch = 0 : i64, scratch_operands = 0 : i64, tpu.core_type = #tpu.core_type<tc>, window_params = [{transform_indices = @transform_0, window_bounds = array<i64: 2, 8, 32>}, {pipeline_mode = #tpu.pipeline_mode<synchronous>, transform_indices = @transform_1, window_bounds = array<i64: 32, 96>}, {transform_indices = @transform_2, window_bounds = array<i64: 2, 8, 32>}]} {
    %c0 = arith.constant 0 : index
    %c0_0 = arith.constant 0 : index
    %c0_1 = arith.constant 0 : index
    %0 = vector.load %arg1[%c0, %c0_0, %c0_1] : memref<2x8x32xf32, #tpu.memory_space<vmem>>, vector<2x8x32xf32>
    %1 = vector.shape_cast %0 : vector<2x8x32xf32> to vector<16x32xf32>
    %c0_2 = arith.constant 0 : index
    %c0_3 = arith.constant 0 : index
    %2 = vector.load %arg2[%c0_2, %c0_3] : memref<32x96xf32, #tpu.memory_space<vmem>>, vector<32x96xf32>
    %cst = arith.constant dense<0.000000e+00> : vector<16x96xf32>
    %3 = tpu.matmul %1, %2, %cst {dimension_numbers = #tpu.dot_dimension_numbers<[1], [0], [0], [1], [0, 0, 1, 1], [], []>} : vector<16x32xf32>, vector<32x96xf32>, vector<16x96xf32> -> vector<16x96xf32>
    %4 = vector.extract_strided_slice %3 {offsets = [0, 0], sizes = [16, 32], strides = [1, 1]} : vector<16x96xf32> to vector<16x32xf32>
    %5 = vector.shape_cast %4 : vector<16x32xf32> to vector<2x8x32xf32>
    %6 = vector.extract_strided_slice %3 {offsets = [0, 32], sizes = [16, 32], strides = [1, 1]} : vector<16x96xf32> to vector<16x32xf32>
    %7 = vector.shape_cast %6 : vector<16x32xf32> to vector<2x8x32xf32>
    %8 = vector.extract_strided_slice %3 {offsets = [0, 64], sizes = [16, 32], strides = [1, 1]} : vector<16x96xf32> to vector<16x32xf32>
    %9 = vector.shape_cast %8 : vector<16x32xf32> to vector<2x8x32xf32>
    "tpu.trace_start"() <{level = 10 : i32, message = "bid,bjd->bij"}> : () -> ()
    %cst_4 = arith.constant dense<0.000000e+00> : vector<2x8x8xf32>
    %10 = tpu.matmul %5, %7, %cst_4 {dimension_numbers = #tpu.dot_dimension_numbers<[2], [2], [1], [1], [0, 0, 0, 1, 1, 1], [0], [0]>} : vector<2x8x32xf32>, vector<2x8x32xf32>, vector<2x8x8xf32> -> vector<2x8x8xf32>
    "tpu.trace_stop"() : () -> ()
    %cst_5 = arith.constant 0.176776692 : f32
    %11 = vector.broadcast %cst_5 : f32 to vector<2x8x8xf32>
    %12 = arith.mulf %10, %11 : vector<2x8x8xf32>
    %cst_6 = arith.constant -1.500000e+01 : f32
    %cst_7 = arith.constant 1.500000e+01 : f32
    %13 = vector.broadcast %cst_6 : f32 to vector<2x8x8xf32>
    %14 = arith.maximumf %13, %12 : vector<2x8x8xf32>
    %15 = vector.broadcast %cst_7 : f32 to vector<2x8x8xf32>
    %16 = arith.minimumf %15, %14 : vector<2x8x8xf32>
    %17 = tpu.iota {dimensions = array<i32: 1>} : vector<1x8x8xi32>
    %18 = tpu.iota {dimensions = array<i32: 2>} : vector<1x8x8xi32>
    %19 = arith.cmpi eq, %17, %18 : vector<1x8x8xi32>
    %20 = arith.extui %19 : vector<1x8x8xi1> to vector<1x8x8xi32>
    %21 = arith.sitofp %20 : vector<1x8x8xi32> to vector<1x8x8xf32>
    %22 = math.exp %16 : vector<2x8x8xf32>
    %cst_8 = arith.constant 9.99999974E-6 : f32
    %23 = vector.broadcast %cst_8 : f32 to vector<2x8x8xf32>
    %24 = arith.addf %22, %23 : vector<2x8x8xf32>
    %cst_9 = arith.constant 0.000000e+00 : f32
    %25 = vector.shape_cast %19 : vector<1x8x8xi1> to vector<1x8x8xi1>
    %26 = vector.broadcast %25 : vector<1x8x8xi1> to vector<2x8x8xi1>
    %27 = vector.broadcast %cst_9 : f32 to vector<2x8x8xf32>
    %28 = arith.select %26, %27, %24 : vector<2x8x8xi1>, vector<2x8x8xf32>
    %cst_10 = arith.constant dense<0.000000e+00> : vector<2x8xf32>
    %29 = vector.multi_reduction <add>, %28, %cst_10 [1] : vector<2x8x8xf32> to vector<2x8xf32>
    %30 = vector.shape_cast %29 : vector<2x8xf32> to vector<2x1x8xf32>
    %31 = vector.broadcast %21 : vector<1x8x8xf32> to vector<2x8x8xf32>
    %32 = vector.broadcast %30 : vector<2x1x8xf32> to vector<2x8x8xf32>
    %33 = arith.mulf %31, %32 : vector<2x8x8xf32>
    %34 = arith.subf %33, %28 : vector<2x8x8xf32>
    %cst_11 = arith.constant 0.000000e+00 : f32
    %35 = vector.shape_cast %19 : vector<1x8x8xi1> to vector<1x8x8xi1>
    %36 = vector.broadcast %35 : vector<1x8x8xi1> to vector<2x8x8xi1>
    %37 = vector.broadcast %cst_11 : f32 to vector<2x8x8xf32>
    %38 = arith.select %36, %22, %37 : vector<2x8x8xi1>, vector<2x8x8xf32>
    %cst_12 = arith.constant dense<0.000000e+00> : vector<2x8xf32>
    %39 = vector.multi_reduction <add>, %38, %cst_12 [1] : vector<2x8x8xf32> to vector<2x8xf32>
    %40 = vector.shape_cast %39 : vector<2x8xf32> to vector<2x1x8xf32>
    %cst_13 = arith.constant dense<0.000000e+00> : vector<2x8xf32>
    %41 = vector.multi_reduction <add>, %38, %cst_13 [2] : vector<2x8x8xf32> to vector<2x8xf32>
    %42 = vector.shape_cast %41 : vector<2x8xf32> to vector<2x8x1xf32>
    %c0_i32 = arith.constant 0 : i32
    %43 = vector.broadcast %c0_i32 : i32 to vector<1x8x8xi32>
    %44 = arith.cmpi eq, %17, %43 : vector<1x8x8xi32>
    %45 = vector.shape_cast %44 : vector<1x8x8xi1> to vector<1x8x8xi1>
    %46 = vector.broadcast %45 : vector<1x8x8xi1> to vector<2x8x8xi1>
    %47 = vector.shape_cast %40 : vector<2x1x8xf32> to vector<2x1x8xf32>
    %48 = vector.broadcast %47 : vector<2x1x8xf32> to vector<2x8x8xf32>
    %49 = arith.select %46, %48, %34 : vector<2x8x8xi1>, vector<2x8x8xf32>
    %50 = tpu.iota {dimensions = array<i32: 1>} : vector<1x8x1xi32>
    %51 = tpu.iota {dimensions = array<i32: 1>} : vector<1x8x8xi32>
    %52 = tpu.iota {dimensions = array<i32: 2>} : vector<1x8x8xi32>
    %53 = arith.cmpi eq, %51, %52 : vector<1x8x8xi32>
    %54 = arith.extui %53 : vector<1x8x8xi1> to vector<1x8x8xi32>
    %55 = arith.sitofp %54 : vector<1x8x8xi32> to vector<1x8x8xf32>
    %56 = vector.shape_cast %55 : vector<1x8x8xf32> to vector<1x8x8xf32>
    %57 = vector.broadcast %56 : vector<1x8x8xf32> to vector<2x8x8xf32>
    %58 = tpu.concatenate %49, %57 in 2 : vector<2x8x8xf32>, vector<2x8x8xf32> -> vector<2x8x16xf32>
    %59 = vector.extract_strided_slice %58 {offsets = [0, 0, 0], sizes = [2, 1, 16], strides = [1, 1, 1]} : vector<2x8x16xf32> to vector<2x1x16xf32>
    %60 = vector.extract_strided_slice %59 {offsets = [0, 0, 0], sizes = [2, 1, 1], strides = [1, 1, 1]} : vector<2x1x16xf32> to vector<2x1x1xf32>
    %61 = math.absf %60 : vector<2x1x1xf32>
    %cst_14 = arith.constant 1.000000e-30 : f32
    %62 = vector.broadcast %cst_14 : f32 to vector<2x1x1xf32>
    %63 = arith.cmpf olt, %61, %62 : vector<2x1x1xf32>
    %cst_15 = arith.constant 0.000000e+00 : f32
    %64 = vector.broadcast %cst_15 : f32 to vector<2x1x1xf32>
    %65 = arith.cmpf olt, %60, %64 : vector<2x1x1xf32>
    %cst_16 = arith.constant -1.000000e-30 : f32
    %cst_17 = arith.constant 1.000000e-30 : f32
    %66 = vector.broadcast %cst_16 : f32 to vector<2x1x1xf32>
    %67 = vector.broadcast %cst_17 : f32 to vector<2x1x1xf32>
    %68 = arith.select %65, %66, %67 : vector<2x1x1xi1>, vector<2x1x1xf32>
    %69 = arith.select %63, %68, %60 : vector<2x1x1xi1>, vector<2x1x1xf32>
    %cst_18 = arith.constant 1.000000e+00 : f32
    %70 = vector.broadcast %cst_18 : f32 to vector<2x1x1xf32>
    %71 = arith.divf %70, %69 : vector<2x1x1xf32>
    %72 = vector.broadcast %71 : vector<2x1x1xf32> to vector<2x1x16xf32>
    %73 = arith.mulf %59, %72 : vector<2x1x16xf32>
    %c0_i32_19 = arith.constant 0 : i32
    %74 = vector.broadcast %c0_i32_19 : i32 to vector<1x8x1xi32>
    %75 = arith.cmpi eq, %50, %74 : vector<1x8x1xi32>
    %cst_20 = arith.constant 1.000000e+00 : f32
    %76 = vector.broadcast %cst_20 : f32 to vector<2x1x1xf32>
    %77 = arith.subf %69, %76 : vector<2x1x1xf32>
    %78 = vector.extract_strided_slice %58 {offsets = [0, 0, 0], sizes = [2, 8, 1], strides = [1, 1, 1]} : vector<2x8x16xf32> to vector<2x8x1xf32>
    %79 = vector.shape_cast %75 : vector<1x8x1xi1> to vector<1x8x1xi1>
    %80 = vector.broadcast %79 : vector<1x8x1xi1> to vector<2x8x1xi1>
    %81 = vector.shape_cast %77 : vector<2x1x1xf32> to vector<2x1x1xf32>
    %82 = vector.broadcast %81 : vector<2x1x1xf32> to vector<2x8x1xf32>
    %83 = arith.select %80, %82, %78 : vector<2x8x1xi1>, vector<2x8x1xf32>
    %84 = vector.broadcast %83 : vector<2x8x1xf32> to vector<2x8x16xf32>
    %85 = vector.broadcast %73 : vector<2x1x16xf32> to vector<2x8x16xf32>
    %86 = arith.mulf %84, %85 : vector<2x8x16xf32>
    %87 = arith.subf %58, %86 : vector<2x8x16xf32>
    %88 = vector.extract_strided_slice %87 {offsets = [0, 1, 0], sizes = [2, 1, 16], strides = [1, 1, 1]} : vector<2x8x16xf32> to vector<2x1x16xf32>
    %89 = vector.extract_strided_slice %88 {offsets = [0, 0, 1], sizes = [2, 1, 1], strides = [1, 1, 1]} : vector<2x1x16xf32> to vector<2x1x1xf32>
    %90 = math.absf %89 : vector<2x1x1xf32>
    %cst_21 = arith.constant 1.000000e-30 : f32
    %91 = vector.broadcast %cst_21 : f32 to vector<2x1x1xf32>
    %92 = arith.cmpf olt, %90, %91 : vector<2x1x1xf32>
    %cst_22 = arith.constant 0.000000e+00 : f32
    %93 = vector.broadcast %cst_22 : f32 to vector<2x1x1xf32>
    %94 = arith.cmpf olt, %89, %93 : vector<2x1x1xf32>
    %cst_23 = arith.constant -1.000000e-30 : f32
    %cst_24 = arith.constant 1.000000e-30 : f32
    %95 = vector.broadcast %cst_23 : f32 to vector<2x1x1xf32>
    %96 = vector.broadcast %cst_24 : f32 to vector<2x1x1xf32>
    %97 = arith.select %94, %95, %96 : vector<2x1x1xi1>, vector<2x1x1xf32>
    %98 = arith.select %92, %97, %89 : vector<2x1x1xi1>, vector<2x1x1xf32>
    %cst_25 = arith.constant 1.000000e+00 : f32
    %99 = vector.broadcast %cst_25 : f32 to vector<2x1x1xf32>
    %100 = arith.divf %99, %98 : vector<2x1x1xf32>
    %101 = vector.broadcast %100 : vector<2x1x1xf32> to vector<2x1x16xf32>
    %102 = arith.mulf %88, %101 : vector<2x1x16xf32>
    %c1_i32 = arith.constant 1 : i32
    %103 = vector.broadcast %c1_i32 : i32 to vector<1x8x1xi32>
    %104 = arith.cmpi eq, %50, %103 : vector<1x8x1xi32>
    %cst_26 = arith.constant 1.000000e+00 : f32
    %105 = vector.broadcast %cst_26 : f32 to vector<2x1x1xf32>
    %106 = arith.subf %98, %105 : vector<2x1x1xf32>
    %107 = vector.extract_strided_slice %87 {offsets = [0, 0, 1], sizes = [2, 8, 1], strides = [1, 1, 1]} : vector<2x8x16xf32> to vector<2x8x1xf32>
    %108 = vector.shape_cast %104 : vector<1x8x1xi1> to vector<1x8x1xi1>
    %109 = vector.broadcast %108 : vector<1x8x1xi1> to vector<2x8x1xi1>
    %110 = vector.shape_cast %106 : vector<2x1x1xf32> to vector<2x1x1xf32>
    %111 = vector.broadcast %110 : vector<2x1x1xf32> to vector<2x8x1xf32>
    %112 = arith.select %109, %111, %107 : vector<2x8x1xi1>, vector<2x8x1xf32>
    %113 = vector.broadcast %112 : vector<2x8x1xf32> to vector<2x8x16xf32>
    %114 = vector.broadcast %102 : vector<2x1x16xf32> to vector<2x8x16xf32>
    %115 = arith.mulf %113, %114 : vector<2x8x16xf32>
    %116 = arith.subf %87, %115 : vector<2x8x16xf32>
    %117 = vector.extract_strided_slice %116 {offsets = [0, 2, 0], sizes = [2, 1, 16], strides = [1, 1, 1]} : vector<2x8x16xf32> to vector<2x1x16xf32>
    %118 = vector.extract_strided_slice %117 {offsets = [0, 0, 2], sizes = [2, 1, 1], strides = [1, 1, 1]} : vector<2x1x16xf32> to vector<2x1x1xf32>
    %119 = math.absf %118 : vector<2x1x1xf32>
    %cst_27 = arith.constant 1.000000e-30 : f32
    %120 = vector.broadcast %cst_27 : f32 to vector<2x1x1xf32>
    %121 = arith.cmpf olt, %119, %120 : vector<2x1x1xf32>
    %cst_28 = arith.constant 0.000000e+00 : f32
    %122 = vector.broadcast %cst_28 : f32 to vector<2x1x1xf32>
    %123 = arith.cmpf olt, %118, %122 : vector<2x1x1xf32>
    %cst_29 = arith.constant -1.000000e-30 : f32
    %cst_30 = arith.constant 1.000000e-30 : f32
    %124 = vector.broadcast %cst_29 : f32 to vector<2x1x1xf32>
    %125 = vector.broadcast %cst_30 : f32 to vector<2x1x1xf32>
    %126 = arith.select %123, %124, %125 : vector<2x1x1xi1>, vector<2x1x1xf32>
    %127 = arith.select %121, %126, %118 : vector<2x1x1xi1>, vector<2x1x1xf32>
    %cst_31 = arith.constant 1.000000e+00 : f32
    %128 = vector.broadcast %cst_31 : f32 to vector<2x1x1xf32>
    %129 = arith.divf %128, %127 : vector<2x1x1xf32>
    %130 = vector.broadcast %129 : vector<2x1x1xf32> to vector<2x1x16xf32>
    %131 = arith.mulf %117, %130 : vector<2x1x16xf32>
    %c2_i32 = arith.constant 2 : i32
    %132 = vector.broadcast %c2_i32 : i32 to vector<1x8x1xi32>
    %133 = arith.cmpi eq, %50, %132 : vector<1x8x1xi32>
    %cst_32 = arith.constant 1.000000e+00 : f32
    %134 = vector.broadcast %cst_32 : f32 to vector<2x1x1xf32>
    %135 = arith.subf %127, %134 : vector<2x1x1xf32>
    %136 = vector.extract_strided_slice %116 {offsets = [0, 0, 2], sizes = [2, 8, 1], strides = [1, 1, 1]} : vector<2x8x16xf32> to vector<2x8x1xf32>
    %137 = vector.shape_cast %133 : vector<1x8x1xi1> to vector<1x8x1xi1>
    %138 = vector.broadcast %137 : vector<1x8x1xi1> to vector<2x8x1xi1>
    %139 = vector.shape_cast %135 : vector<2x1x1xf32> to vector<2x1x1xf32>
    %140 = vector.broadcast %139 : vector<2x1x1xf32> to vector<2x8x1xf32>
    %141 = arith.select %138, %140, %136 : vector<2x8x1xi1>, vector<2x8x1xf32>
    %142 = vector.broadcast %141 : vector<2x8x1xf32> to vector<2x8x16xf32>
    %143 = vector.broadcast %131 : vector<2x1x16xf32> to vector<2x8x16xf32>
    %144 = arith.mulf %142, %143 : vector<2x8x16xf32>
    %145 = arith.subf %116, %144 : vector<2x8x16xf32>
    %146 = vector.extract_strided_slice %145 {offsets = [0, 3, 0], sizes = [2, 1, 16], strides = [1, 1, 1]} : vector<2x8x16xf32> to vector<2x1x16xf32>
    %147 = vector.extract_strided_slice %146 {offsets = [0, 0, 3], sizes = [2, 1, 1], strides = [1, 1, 1]} : vector<2x1x16xf32> to vector<2x1x1xf32>
    %148 = math.absf %147 : vector<2x1x1xf32>
    %cst_33 = arith.constant 1.000000e-30 : f32
    %149 = vector.broadcast %cst_33 : f32 to vector<2x1x1xf32>
    %150 = arith.cmpf olt, %148, %149 : vector<2x1x1xf32>
    %cst_34 = arith.constant 0.000000e+00 : f32
    %151 = vector.broadcast %cst_34 : f32 to vector<2x1x1xf32>
    %152 = arith.cmpf olt, %147, %151 : vector<2x1x1xf32>
    %cst_35 = arith.constant -1.000000e-30 : f32
    %cst_36 = arith.constant 1.000000e-30 : f32
    %153 = vector.broadcast %cst_35 : f32 to vector<2x1x1xf32>
    %154 = vector.broadcast %cst_36 : f32 to vector<2x1x1xf32>
    %155 = arith.select %152, %153, %154 : vector<2x1x1xi1>, vector<2x1x1xf32>
    %156 = arith.select %150, %155, %147 : vector<2x1x1xi1>, vector<2x1x1xf32>
    %cst_37 = arith.constant 1.000000e+00 : f32
    %157 = vector.broadcast %cst_37 : f32 to vector<2x1x1xf32>
    %158 = arith.divf %157, %156 : vector<2x1x1xf32>
    %159 = vector.broadcast %158 : vector<2x1x1xf32> to vector<2x1x16xf32>
    %160 = arith.mulf %146, %159 : vector<2x1x16xf32>
    %c3_i32 = arith.constant 3 : i32
    %161 = vector.broadcast %c3_i32 : i32 to vector<1x8x1xi32>
    %162 = arith.cmpi eq, %50, %161 : vector<1x8x1xi32>
    %cst_38 = arith.constant 1.000000e+00 : f32
    %163 = vector.broadcast %cst_38 : f32 to vector<2x1x1xf32>
    %164 = arith.subf %156, %163 : vector<2x1x1xf32>
    %165 = vector.extract_strided_slice %145 {offsets = [0, 0, 3], sizes = [2, 8, 1], strides = [1, 1, 1]} : vector<2x8x16xf32> to vector<2x8x1xf32>
    %166 = vector.shape_cast %162 : vector<1x8x1xi1> to vector<1x8x1xi1>
    %167 = vector.broadcast %166 : vector<1x8x1xi1> to vector<2x8x1xi1>
    %168 = vector.shape_cast %164 : vector<2x1x1xf32> to vector<2x1x1xf32>
    %169 = vector.broadcast %168 : vector<2x1x1xf32> to vector<2x8x1xf32>
    %170 = arith.select %167, %169, %165 : vector<2x8x1xi1>, vector<2x8x1xf32>
    %171 = vector.broadcast %170 : vector<2x8x1xf32> to vector<2x8x16xf32>
    %172 = vector.broadcast %160 : vector<2x1x16xf32> to vector<2x8x16xf32>
    %173 = arith.mulf %171, %172 : vector<2x8x16xf32>
    %174 = arith.subf %145, %173 : vector<2x8x16xf32>
    %175 = vector.extract_strided_slice %174 {offsets = [0, 4, 0], sizes = [2, 1, 16], strides = [1, 1, 1]} : vector<2x8x16xf32> to vector<2x1x16xf32>
    %176 = vector.extract_strided_slice %175 {offsets = [0, 0, 4], sizes = [2, 1, 1], strides = [1, 1, 1]} : vector<2x1x16xf32> to vector<2x1x1xf32>
    %177 = math.absf %176 : vector<2x1x1xf32>
    %cst_39 = arith.constant 1.000000e-30 : f32
    %178 = vector.broadcast %cst_39 : f32 to vector<2x1x1xf32>
    %179 = arith.cmpf olt, %177, %178 : vector<2x1x1xf32>
    %cst_40 = arith.constant 0.000000e+00 : f32
    %180 = vector.broadcast %cst_40 : f32 to vector<2x1x1xf32>
    %181 = arith.cmpf olt, %176, %180 : vector<2x1x1xf32>
    %cst_41 = arith.constant -1.000000e-30 : f32
    %cst_42 = arith.constant 1.000000e-30 : f32
    %182 = vector.broadcast %cst_41 : f32 to vector<2x1x1xf32>
    %183 = vector.broadcast %cst_42 : f32 to vector<2x1x1xf32>
    %184 = arith.select %181, %182, %183 : vector<2x1x1xi1>, vector<2x1x1xf32>
    %185 = arith.select %179, %184, %176 : vector<2x1x1xi1>, vector<2x1x1xf32>
    %cst_43 = arith.constant 1.000000e+00 : f32
    %186 = vector.broadcast %cst_43 : f32 to vector<2x1x1xf32>
    %187 = arith.divf %186, %185 : vector<2x1x1xf32>
    %188 = vector.broadcast %187 : vector<2x1x1xf32> to vector<2x1x16xf32>
    %189 = arith.mulf %175, %188 : vector<2x1x16xf32>
    %c4_i32 = arith.constant 4 : i32
    %190 = vector.broadcast %c4_i32 : i32 to vector<1x8x1xi32>
    %191 = arith.cmpi eq, %50, %190 : vector<1x8x1xi32>
    %cst_44 = arith.constant 1.000000e+00 : f32
    %192 = vector.broadcast %cst_44 : f32 to vector<2x1x1xf32>
    %193 = arith.subf %185, %192 : vector<2x1x1xf32>
    %194 = vector.extract_strided_slice %174 {offsets = [0, 0, 4], sizes = [2, 8, 1], strides = [1, 1, 1]} : vector<2x8x16xf32> to vector<2x8x1xf32>
    %195 = vector.shape_cast %191 : vector<1x8x1xi1> to vector<1x8x1xi1>
    %196 = vector.broadcast %195 : vector<1x8x1xi1> to vector<2x8x1xi1>
    %197 = vector.shape_cast %193 : vector<2x1x1xf32> to vector<2x1x1xf32>
    %198 = vector.broadcast %197 : vector<2x1x1xf32> to vector<2x8x1xf32>
    %199 = arith.select %196, %198, %194 : vector<2x8x1xi1>, vector<2x8x1xf32>
    %200 = vector.broadcast %199 : vector<2x8x1xf32> to vector<2x8x16xf32>
    %201 = vector.broadcast %189 : vector<2x1x16xf32> to vector<2x8x16xf32>
    %202 = arith.mulf %200, %201 : vector<2x8x16xf32>
    %203 = arith.subf %174, %202 : vector<2x8x16xf32>
    %204 = vector.extract_strided_slice %203 {offsets = [0, 5, 0], sizes = [2, 1, 16], strides = [1, 1, 1]} : vector<2x8x16xf32> to vector<2x1x16xf32>
    %205 = vector.extract_strided_slice %204 {offsets = [0, 0, 5], sizes = [2, 1, 1], strides = [1, 1, 1]} : vector<2x1x16xf32> to vector<2x1x1xf32>
    %206 = math.absf %205 : vector<2x1x1xf32>
    %cst_45 = arith.constant 1.000000e-30 : f32
    %207 = vector.broadcast %cst_45 : f32 to vector<2x1x1xf32>
    %208 = arith.cmpf olt, %206, %207 : vector<2x1x1xf32>
    %cst_46 = arith.constant 0.000000e+00 : f32
    %209 = vector.broadcast %cst_46 : f32 to vector<2x1x1xf32>
    %210 = arith.cmpf olt, %205, %209 : vector<2x1x1xf32>
    %cst_47 = arith.constant -1.000000e-30 : f32
    %cst_48 = arith.constant 1.000000e-30 : f32
    %211 = vector.broadcast %cst_47 : f32 to vector<2x1x1xf32>
    %212 = vector.broadcast %cst_48 : f32 to vector<2x1x1xf32>
    %213 = arith.select %210, %211, %212 : vector<2x1x1xi1>, vector<2x1x1xf32>
    %214 = arith.select %208, %213, %205 : vector<2x1x1xi1>, vector<2x1x1xf32>
    %cst_49 = arith.constant 1.000000e+00 : f32
    %215 = vector.broadcast %cst_49 : f32 to vector<2x1x1xf32>
    %216 = arith.divf %215, %214 : vector<2x1x1xf32>
    %217 = vector.broadcast %216 : vector<2x1x1xf32> to vector<2x1x16xf32>
    %218 = arith.mulf %204, %217 : vector<2x1x16xf32>
    %c5_i32 = arith.constant 5 : i32
    %219 = vector.broadcast %c5_i32 : i32 to vector<1x8x1xi32>
    %220 = arith.cmpi eq, %50, %219 : vector<1x8x1xi32>
    %cst_50 = arith.constant 1.000000e+00 : f32
    %221 = vector.broadcast %cst_50 : f32 to vector<2x1x1xf32>
    %222 = arith.subf %214, %221 : vector<2x1x1xf32>
    %223 = vector.extract_strided_slice %203 {offsets = [0, 0, 5], sizes = [2, 8, 1], strides = [1, 1, 1]} : vector<2x8x16xf32> to vector<2x8x1xf32>
    %224 = vector.shape_cast %220 : vector<1x8x1xi1> to vector<1x8x1xi1>
    %225 = vector.broadcast %224 : vector<1x8x1xi1> to vector<2x8x1xi1>
    %226 = vector.shape_cast %222 : vector<2x1x1xf32> to vector<2x1x1xf32>
    %227 = vector.broadcast %226 : vector<2x1x1xf32> to vector<2x8x1xf32>
    %228 = arith.select %225, %227, %223 : vector<2x8x1xi1>, vector<2x8x1xf32>
    %229 = vector.broadcast %228 : vector<2x8x1xf32> to vector<2x8x16xf32>
    %230 = vector.broadcast %218 : vector<2x1x16xf32> to vector<2x8x16xf32>
    %231 = arith.mulf %229, %230 : vector<2x8x16xf32>
    %232 = arith.subf %203, %231 : vector<2x8x16xf32>
    %233 = vector.extract_strided_slice %232 {offsets = [0, 6, 0], sizes = [2, 1, 16], strides = [1, 1, 1]} : vector<2x8x16xf32> to vector<2x1x16xf32>
    %234 = vector.extract_strided_slice %233 {offsets = [0, 0, 6], sizes = [2, 1, 1], strides = [1, 1, 1]} : vector<2x1x16xf32> to vector<2x1x1xf32>
    %235 = math.absf %234 : vector<2x1x1xf32>
    %cst_51 = arith.constant 1.000000e-30 : f32
    %236 = vector.broadcast %cst_51 : f32 to vector<2x1x1xf32>
    %237 = arith.cmpf olt, %235, %236 : vector<2x1x1xf32>
    %cst_52 = arith.constant 0.000000e+00 : f32
    %238 = vector.broadcast %cst_52 : f32 to vector<2x1x1xf32>
    %239 = arith.cmpf olt, %234, %238 : vector<2x1x1xf32>
    %cst_53 = arith.constant -1.000000e-30 : f32
    %cst_54 = arith.constant 1.000000e-30 : f32
    %240 = vector.broadcast %cst_53 : f32 to vector<2x1x1xf32>
    %241 = vector.broadcast %cst_54 : f32 to vector<2x1x1xf32>
    %242 = arith.select %239, %240, %241 : vector<2x1x1xi1>, vector<2x1x1xf32>
    %243 = arith.select %237, %242, %234 : vector<2x1x1xi1>, vector<2x1x1xf32>
    %cst_55 = arith.constant 1.000000e+00 : f32
    %244 = vector.broadcast %cst_55 : f32 to vector<2x1x1xf32>
    %245 = arith.divf %244, %243 : vector<2x1x1xf32>
    %246 = vector.broadcast %245 : vector<2x1x1xf32> to vector<2x1x16xf32>
    %247 = arith.mulf %233, %246 : vector<2x1x16xf32>
    %c6_i32 = arith.constant 6 : i32
    %248 = vector.broadcast %c6_i32 : i32 to vector<1x8x1xi32>
    %249 = arith.cmpi eq, %50, %248 : vector<1x8x1xi32>
    %cst_56 = arith.constant 1.000000e+00 : f32
    %250 = vector.broadcast %cst_56 : f32 to vector<2x1x1xf32>
    %251 = arith.subf %243, %250 : vector<2x1x1xf32>
    %252 = vector.extract_strided_slice %232 {offsets = [0, 0, 6], sizes = [2, 8, 1], strides = [1, 1, 1]} : vector<2x8x16xf32> to vector<2x8x1xf32>
    %253 = vector.shape_cast %249 : vector<1x8x1xi1> to vector<1x8x1xi1>
    %254 = vector.broadcast %253 : vector<1x8x1xi1> to vector<2x8x1xi1>
    %255 = vector.shape_cast %251 : vector<2x1x1xf32> to vector<2x1x1xf32>
    %256 = vector.broadcast %255 : vector<2x1x1xf32> to vector<2x8x1xf32>
    %257 = arith.select %254, %256, %252 : vector<2x8x1xi1>, vector<2x8x1xf32>
    %258 = vector.broadcast %257 : vector<2x8x1xf32> to vector<2x8x16xf32>
    %259 = vector.broadcast %247 : vector<2x1x16xf32> to vector<2x8x16xf32>
    %260 = arith.mulf %258, %259 : vector<2x8x16xf32>
    %261 = arith.subf %232, %260 : vector<2x8x16xf32>
    %262 = vector.extract_strided_slice %261 {offsets = [0, 7, 0], sizes = [2, 1, 16], strides = [1, 1, 1]} : vector<2x8x16xf32> to vector<2x1x16xf32>
    %263 = vector.extract_strided_slice %262 {offsets = [0, 0, 7], sizes = [2, 1, 1], strides = [1, 1, 1]} : vector<2x1x16xf32> to vector<2x1x1xf32>
    %264 = math.absf %263 : vector<2x1x1xf32>
    %cst_57 = arith.constant 1.000000e-30 : f32
    %265 = vector.broadcast %cst_57 : f32 to vector<2x1x1xf32>
    %266 = arith.cmpf olt, %264, %265 : vector<2x1x1xf32>
    %cst_58 = arith.constant 0.000000e+00 : f32
    %267 = vector.broadcast %cst_58 : f32 to vector<2x1x1xf32>
    %268 = arith.cmpf olt, %263, %267 : vector<2x1x1xf32>
    %cst_59 = arith.constant -1.000000e-30 : f32
    %cst_60 = arith.constant 1.000000e-30 : f32
    %269 = vector.broadcast %cst_59 : f32 to vector<2x1x1xf32>
    %270 = vector.broadcast %cst_60 : f32 to vector<2x1x1xf32>
    %271 = arith.select %268, %269, %270 : vector<2x1x1xi1>, vector<2x1x1xf32>
    %272 = arith.select %266, %271, %263 : vector<2x1x1xi1>, vector<2x1x1xf32>
    %cst_61 = arith.constant 1.000000e+00 : f32
    %273 = vector.broadcast %cst_61 : f32 to vector<2x1x1xf32>
    %274 = arith.divf %273, %272 : vector<2x1x1xf32>
    %275 = vector.broadcast %274 : vector<2x1x1xf32> to vector<2x1x16xf32>
    %276 = arith.mulf %262, %275 : vector<2x1x16xf32>
    %c7_i32 = arith.constant 7 : i32
    %277 = vector.broadcast %c7_i32 : i32 to vector<1x8x1xi32>
    %278 = arith.cmpi eq, %50, %277 : vector<1x8x1xi32>
    %cst_62 = arith.constant 1.000000e+00 : f32
    %279 = vector.broadcast %cst_62 : f32 to vector<2x1x1xf32>
    %280 = arith.subf %272, %279 : vector<2x1x1xf32>
    %281 = vector.extract_strided_slice %261 {offsets = [0, 0, 7], sizes = [2, 8, 1], strides = [1, 1, 1]} : vector<2x8x16xf32> to vector<2x8x1xf32>
    %282 = vector.shape_cast %278 : vector<1x8x1xi1> to vector<1x8x1xi1>
    %283 = vector.broadcast %282 : vector<1x8x1xi1> to vector<2x8x1xi1>
    %284 = vector.shape_cast %280 : vector<2x1x1xf32> to vector<2x1x1xf32>
    %285 = vector.broadcast %284 : vector<2x1x1xf32> to vector<2x8x1xf32>
    %286 = arith.select %283, %285, %281 : vector<2x8x1xi1>, vector<2x8x1xf32>
    %287 = vector.broadcast %286 : vector<2x8x1xf32> to vector<2x8x16xf32>
    %288 = vector.broadcast %276 : vector<2x1x16xf32> to vector<2x8x16xf32>
    %289 = arith.mulf %287, %288 : vector<2x8x16xf32>
    %290 = arith.subf %261, %289 : vector<2x8x16xf32>
    %291 = vector.extract_strided_slice %290 {offsets = [0, 0, 8], sizes = [2, 8, 8], strides = [1, 1, 1]} : vector<2x8x16xf32> to vector<2x8x8xf32>
    %292 = tpu.transpose %22, [0, 2, 1] : vector<2x8x8xf32> -> vector<2x8x8xf32>
    %cst_63 = arith.constant 0.000000e+00 : f32
    %293 = vector.shape_cast %19 : vector<1x8x8xi1> to vector<1x8x8xi1>
    %294 = vector.broadcast %293 : vector<1x8x8xi1> to vector<2x8x8xi1>
    %295 = vector.broadcast %cst_63 : f32 to vector<2x8x8xf32>
    %296 = arith.select %294, %291, %295 : vector<2x8x8xi1>, vector<2x8x8xf32>
    %cst_64 = arith.constant dense<0.000000e+00> : vector<2x8xf32>
    %297 = vector.multi_reduction <add>, %296, %cst_64 [2] : vector<2x8x8xf32> to vector<2x8xf32>
    %298 = vector.shape_cast %297 : vector<2x8xf32> to vector<2x8x1xf32>
    %c0_i32_65 = arith.constant 0 : i32
    %299 = vector.broadcast %c0_i32_65 : i32 to vector<1x8x8xi32>
    %300 = arith.cmpi eq, %17, %299 : vector<1x8x8xi32>
    %301 = vector.broadcast %298 : vector<2x8x1xf32> to vector<2x8x8xf32>
    %302 = arith.mulf %292, %301 : vector<2x8x8xf32>
    %cst_66 = arith.constant 0.000000e+00 : f32
    %303 = vector.shape_cast %300 : vector<1x8x8xi1> to vector<1x8x8xi1>
    %304 = vector.broadcast %303 : vector<1x8x8xi1> to vector<2x8x8xi1>
    %305 = vector.broadcast %cst_66 : f32 to vector<2x8x8xf32>
    %306 = arith.select %304, %305, %302 : vector<2x8x8xi1>, vector<2x8x8xf32>
    %c0_i32_67 = arith.constant 0 : i32
    %307 = vector.broadcast %c0_i32_67 : i32 to vector<1x8x8xi32>
    %308 = arith.cmpi eq, %18, %307 : vector<1x8x8xi32>
    %309 = arith.mulf %292, %291 : vector<2x8x8xf32>
    %cst_68 = arith.constant 0.000000e+00 : f32
    %310 = vector.shape_cast %308 : vector<1x8x8xi1> to vector<1x8x8xi1>
    %311 = vector.broadcast %310 : vector<1x8x8xi1> to vector<2x8x8xi1>
    %312 = vector.broadcast %cst_68 : f32 to vector<2x8x8xf32>
    %313 = arith.select %311, %312, %309 : vector<2x8x8xi1>, vector<2x8x8xf32>
    %314 = vector.extract_strided_slice %291 {offsets = [0, 0, 0], sizes = [2, 8, 1], strides = [1, 1, 1]} : vector<2x8x8xf32> to vector<2x8x1xf32>
    %315 = arith.mulf %42, %314 : vector<2x8x1xf32>
    %316 = arith.subf %306, %313 : vector<2x8x8xf32>
    %317 = vector.broadcast %21 : vector<1x8x8xf32> to vector<2x8x8xf32>
    %318 = vector.broadcast %315 : vector<2x8x1xf32> to vector<2x8x8xf32>
    %319 = arith.mulf %317, %318 : vector<2x8x8xf32>
    %320 = arith.addf %316, %319 : vector<2x8x8xf32>
    "tpu.trace_start"() <{level = 10 : i32, message = "bji,bid->bjd"}> : () -> ()
    %cst_69 = arith.constant dense<0.000000e+00> : vector<2x8x32xf32>
    %321 = tpu.matmul %320, %9, %cst_69 {dimension_numbers = #tpu.dot_dimension_numbers<[2], [1], [1], [2], [0, 0, 0, 1, 1, 2], [0], [0]>} : vector<2x8x8xf32>, vector<2x8x32xf32>, vector<2x8x32xf32> -> vector<2x8x32xf32>
    "tpu.trace_stop"() : () -> ()
    %c0_70 = arith.constant 0 : index
    %c0_71 = arith.constant 0 : index
    %c0_72 = arith.constant 0 : index
    %322 = vector.load %arg3[%c0_70, %c0_71, %c0_72] : memref<2x8x32xf32, #tpu.memory_space<vmem>>, vector<2x8x32xf32>
    tpu.vector_store %arg3[%c0_70, %c0_71, %c0_72], %321 {strides = array<i32>} : memref<2x8x32xf32, #tpu.memory_space<vmem>>, vector<2x8x32xf32>,
    return
  }
  func.func @transform_0(%arg0: i32) -> (i32, i32, i32) {
    %c0_i32 = arith.constant 0 : i32
    %c0_i32_0 = arith.constant 0 : i32
    %c0_i32_1 = arith.constant 0 : i32
    return %arg0, %c0_i32, %c0_i32_0 : i32, i32, i32
  }
  func.func @transform_1(%arg0: i32) -> (i32, i32) {
    %c0_i32 = arith.constant 0 : i32
    %c0_i32_0 = arith.constant 0 : i32
    %c0_i32_1 = arith.constant 0 : i32
    return %c0_i32, %c0_i32_0 : i32, i32
  }
  func.func @transform_2(%arg0: i32) -> (i32, i32, i32) {
    %c0_i32 = arith.constant 0 : i32
    %c0_i32_0 = arith.constant 0 : i32
    %c0_i32_1 = arith.constant 0 : i32
    return %arg0, %c0_i32, %c0_i32_0 : i32, i32, i32
  }
}

</mosaic_0001>

<llo_original>
// kernel: tpu_custom_call.1
$region0: #{tpu_custom_call.1}
  #allocation0 [shape = 'u32[]', space=smem, size = 0x4, offset = 0x4, fixed_abs, tag = 'smem constant byte address 0x4 - core index']
  #allocation1 [shape = 'u32[144,128]{1,0:T(1,128)}', space=vmem, size = 0x12000, scoped, tag = 'internal scratch']
  %s0 = inlined_call_operand.hbm [shape: f32[2,8,32], index: 0, kind: input, shape index: {}]
  %s1 = inlined_call_operand.hbm [shape: f32[32,96], index: 1, kind: input, shape index: {}]
  %s2 = inlined_call_operand.hbm [shape: f32[2,8,32], index: 2, kind: output, shape index: {}]
  %s3 = sld [smem:[#allocation0]]
  $region26: #{tpu_custom_call.1} parent=0
    _
  %s5 = ssub.s32 1, %s3
  %s6 = scalar_select 0, %s5, %s3
  $region1: #{tpu_custom_call.1} parent=0
    #allocation2 [shape = 'u8[8192]{0}', space=vmem, size = 0x2000, scoped, tag = 'input window, operand 0, single buffered']
    #allocation3 [shape = 's32[1]{0}', space=sflag, size = 0x4, scoped, tag = 'scoped memory for tpu_custom_call.1']
    #allocation4 [shape = 's32[1]{0}', space=sflag, size = 0x4, scoped, tag = 'scoped memory for tpu_custom_call.1']
    #allocation5 [shape = 'u8[16384]{0}', space=vmem, size = 0x4000, scoped, tag = 'input window, operand 1, single buffered']
    #allocation6 [shape = 's32[1]{0}', space=sflag, size = 0x4, scoped, tag = 'scoped memory for tpu_custom_call.1']
    #allocation7 [shape = 'u8[8192]{0}', space=vmem, size = 0x2000, scoped, tag = 'output window, operand 0, single buffered']
    %7 = vsyncpa [#allocation3], 0
    %8 = vsyncpa [#allocation6], 0
    %9 = vsyncpa [#allocation4], 0
    // Predicated region
    $region2: #{tpu_custom_call.1} parent=1 // pred_check
      _
    $region3: #{tpu_custom_call.1} parent=1 // pred_check_branch
      %11 = sbr.rel (0) target = $region5
    $region4: #{tpu_custom_call.1} parent=1 // pred_region
      %s13 = ssub.s32 256, 256
      %14 = vsyncadd [#allocation3], %s13
      %s15 = sshll.u32 [#allocation2], 4
      %s16 = int_to_ptr.vmem [resolvable:$true] %s15
      %21 = dma.hbm_to_vmem [thread:$0]  %s0, 256, %s16, [#allocation3], 128, 128, 8
    $region5: #{tpu_custom_call.1} parent=1 // pred_fallthru
      _
    // Predicated region
    $region6: #{tpu_custom_call.1} parent=1 // pred_check
      _
    $region7: #{tpu_custom_call.1} parent=1 // pred_check_branch
      %23 = sbr.rel (0) target = $region9
    $region8: #{tpu_custom_call.1} parent=1 // pred_region
      %s25 = ssub.s32 512, 512
      %26 = vsyncadd [#allocation6], %s25
      %s27 = sshll.u32 [#allocation5], 4
      %s28 = int_to_ptr.vmem [resolvable:$true] %s27
      %33 = dma.hbm_to_vmem [thread:$0]  %s1, 512, %s28, [#allocation6], 128, 128, 8
    $region9: #{tpu_custom_call.1} parent=1 // pred_fallthru
      _
    // Predicated region
    $region10: #{tpu_custom_call.1} parent=1 // pred_check
      _
    $region11: #{tpu_custom_call.1} parent=1 // pred_check_branch
      %35 = sbr.rel (0) target = $region13
    $region12: #{tpu_custom_call.1} parent=1 // pred_region
      %36 = dma.done [#allocation3], 256
    $region13: #{tpu_custom_call.1} parent=1 // pred_fallthru
      _
    // Predicated region
    $region14: #{tpu_custom_call.1} parent=1 // pred_check
      _
    $region15: #{tpu_custom_call.1} parent=1 // pred_check_branch
      %38 = sbr.rel (0) target = $region17
    $region16: #{tpu_custom_call.1} parent=1 // pred_region
      %39 = dma.done [#allocation6], 512
    $region17: #{tpu_custom_call.1} parent=1 // pred_fallthru
      _
    %v40 = vld [vmem:[#allocation2] sm:$0xff]
    %v41 = vld [vmem:[#allocation2 + $0x8] sm:$0xff]
    %v42 = vld [vmem:[#allocation5] sm:$0xff]
    %v43 = vld [vmem:[#allocation5 + $0x8] sm:$0xff]
    %v44 = vld [vmem:[#allocation5 + $0x10] sm:$0xff]
    %v45 = vld [vmem:[#allocation5 + $0x18] sm:$0xff]
    %vm46 = vcmask 261120
    %v48 = vsel %vm46, %v40, 0
    %v51 = vsel %vm46, %v41, 0
    %53 = vmatprep.subr.mxu0 0.0
    %54 = vmatpush1.msra.mxu0 0.0
    %55 = vmatprep.subr.mxu0 0.0
    %56 = vmatpush1.msra.mxu0 0.0
    %57 = vmatprep.subr.mxu0 0.0
    %58 = vmatpush1.msra.mxu0 0.0
    %59 = vmatprep.subr.mxu0 0.0
    %60 = vmatpush1.msra.mxu0 0.0
    %61 = vmatprep.subr.mxu0 0.0
    %62 = vmatpush1.msra.mxu0 0.0
    %63 = vmatprep.subr.mxu0 0.0
    %64 = vmatpush1.msra.mxu0 0.0
    %65 = vmatprep.subr.mxu0 0.0
    %66 = vmatpush1.msra.mxu0 0.0
    %67 = vmatprep.subr.mxu0 0.0
    %68 = vmatpush1.msra.mxu0 0.0
    %69 = vmatprep.subr.mxu0 0.0
    %70 = vmatpush1.msra.mxu0 0.0
    %71 = vmatprep.subr.mxu0 0.0
    %72 = vmatpush1.msra.mxu0 0.0
    %73 = vmatprep.subr.mxu0 0.0
    %74 = vmatpush1.msra.mxu0 0.0
    %75 = vmatprep.subr.mxu0 0.0
    %76 = vmatpush1.msra.mxu0 0.0
    %77 = vmatprep.subr.mxu0 0.0
    %78 = vmatpush1.msra.mxu0 %v45
    %79 = vmatprep.subr.mxu0 0.0
    %80 = vmatpush1.msra.mxu0 %v44
    %81 = vmatprep.subr.mxu0 0.0
    %82 = vmatpush1.msra.mxu0 %v43
    %83 = vmatprep.subr.mxu0 0.0
    %84 = vmatpush1.msra.mxu0 %v42
    %85 = vmatprep.subr.mxu0 0.0
    %86 = vmatpush2.msra.mxu0 0.0
    %87 = vmatprep.subr.mxu0 0.0
    %88 = vmatpush2.msra.mxu0 0.0
    %89 = vmatprep.subr.mxu0 0.0
    %90 = vmatpush2.msra.mxu0 0.0
    %91 = vmatprep.subr.mxu0 0.0
    %92 = vmatpush2.msra.mxu0 0.0
    %93 = vmatprep.subr.mxu0 0.0
    %94 = vmatpush2.msra.mxu0 0.0
    %95 = vmatprep.subr.mxu0 0.0
    %96 = vmatpush2.msra.mxu0 0.0
    %97 = vmatprep.subr.mxu0 0.0
    %98 = vmatpush2.msra.mxu0 0.0
    %99 = vmatprep.subr.mxu0 0.0
    %100 = vmatpush2.msra.mxu0 0.0
    %101 = vmatprep.subr.mxu0 0.0
    %102 = vmatpush2.msra.mxu0 0.0
    %103 = vmatprep.subr.mxu0 0.0
    %104 = vmatpush2.msra.mxu0 0.0
    %105 = vmatprep.subr.mxu0 0.0
    %106 = vmatpush2.msra.mxu0 0.0
    %107 = vmatprep.subr.mxu0 0.0
    %108 = vmatpush2.msra.mxu0 0.0
    %109 = vmatprep.subr.mxu0 0.0
    %110 = vmatpush2.msra.mxu0 0.0
    %111 = vmatprep.subr.mxu0 0.0
    %112 = vmatpush2.msra.mxu0 0.0
    %113 = vmatprep.subr.mxu0 0.0
    %114 = vmatpush2.msra.mxu0 0.0
    %115 = vmatprep.subr.mxu0 0.0
    %116 = vmatpush2.msra.mxu0 0.0
    %117 = vmatprep.mubr.f32.mxu0 0.0
    %118 = vmatmul.mubr.f32.gmra.mxu0 %v48
    %v119 = vpop.f32.mrf.mxu0
    %v120 = vadd.f32 0.0, %v119
    %v121 = vpop.f32.mrf.mxu0
    %122 = vmatprep.mubr.f32.mxu0 0.0
    %123 = vmatmul.mubr.f32.gmra.mxu0 %v51
    %v124 = vpop.f32.mrf.mxu0
    %v125 = vadd.f32 0.0, %v124
    %v126 = vpop.f32.mrf.mxu0
    %127 = vdwg.mxu0
    %129 = vrot.lane.b32.xlu0 %v120, 96
    %v130 = vpop.permute.xlu0 %129
    %v131 = vsel %vm46, %v120, 0
    %v133 = vsel %vm46, %v130, 0
    %135 = vmatprep.subr.mxu0 0.0
    %136 = vmatpush1.xpose.msra.mxu0 0.0
    %137 = vmatprep.subr.mxu0 0.0
    %138 = vmatpush1.xpose.msra.mxu0 0.0
    %139 = vmatprep.subr.mxu0 0.0
    %140 = vmatpush1.xpose.msra.mxu0 0.0
    %141 = vmatprep.subr.mxu0 0.0
    %142 = vmatpush1.xpose.msra.mxu0 0.0
    %143 = vmatprep.subr.mxu0 0.0
    %144 = vmatpush1.xpose.msra.mxu0 0.0
    %145 = vmatprep.subr.mxu0 0.0
    %146 = vmatpush1.xpose.msra.mxu0 0.0
    %147 = vmatprep.subr.mxu0 0.0
    %148 = vmatpush1.xpose.msra.mxu0 0.0
    %149 = vmatprep.subr.mxu0 0.0
    %150 = vmatpush1.xpose.msra.mxu0 0.0
    %151 = vmatprep.subr.mxu0 0.0
    %152 = vmatpush1.xpose.msra.mxu0 0.0
    %153 = vmatprep.subr.mxu0 0.0
    %154 = vmatpush1.xpose.msra.mxu0 0.0
    %155 = vmatprep.subr.mxu0 0.0
    %156 = vmatpush1.xpose.msra.mxu0 0.0
    %157 = vmatprep.subr.mxu0 0.0
    %158 = vmatpush1.xpose.msra.mxu0 0.0
    %159 = vmatprep.subr.mxu0 0.0
    %160 = vmatpush1.xpose.msra.mxu0 0.0
    %161 = vmatprep.subr.mxu0 0.0
    %162 = vmatpush1.xpose.msra.mxu0 0.0
    %163 = vmatprep.subr.mxu0 0.0
    %164 = vmatpush1.xpose.msra.mxu0 0.0
    %165 = vmatprep.subr.mxu0 0.0
    %166 = vmatpush1.xpose.msra.mxu0 %v133
    %167 = vmatprep.subr.mxu0 0.0
    %168 = vmatpush2.xpose.msra.mxu0 0.0
    %169 = vmatprep.subr.mxu0 0.0
    %170 = vmatpush2.xpose.msra.mxu0 0.0
    %171 = vmatprep.subr.mxu0 0.0
    %172 = vmatpush2.xpose.msra.mxu0 0.0
    %173 = vmatprep.subr.mxu0 0.0
    %174 = vmatpush2.xpose.msra.mxu0 0.0
    %175 = vmatprep.subr.mxu0 0.0
    %176 = vmatpush2.xpose.msra.mxu0 0.0
    %177 = vmatprep.subr.mxu0 0.0
    %178 = vmatpush2.xpose.msra.mxu0 0.0
    %179 = vmatprep.subr.mxu0 0.0
    %180 = vmatpush2.xpose.msra.mxu0 0.0
    %181 = vmatprep.subr.mxu0 0.0
    %182 = vmatpush2.xpose.msra.mxu0 0.0
    %183 = vmatprep.subr.mxu0 0.0
    %184 = vmatpush2.xpose.msra.mxu0 0.0
    %185 = vmatprep.subr.mxu0 0.0
    %186 = vmatpush2.xpose.msra.mxu0 0.0
    %187 = vmatprep.subr.mxu0 0.0
    %188 = vmatpush2.xpose.msra.mxu0 0.0
    %189 = vmatprep.subr.mxu0 0.0
    %190 = vmatpush2.xpose.msra.mxu0 0.0
    %191 = vmatprep.subr.mxu0 0.0
    %192 = vmatpush2.xpose.msra.mxu0 0.0
    %193 = vmatprep.subr.mxu0 0.0
    %194 = vmatpush2.xpose.msra.mxu0 0.0
    %195 = vmatprep.subr.mxu0 0.0
    %196 = vmatpush2.xpose.msra.mxu0 0.0
    %197 = vmatprep.subr.mxu0 0.0
    %198 = vmatpush2.xpose.msra.mxu0 0.0
    %199 = vmatprep.mubr.f32.mxu0 0.0
    %200 = vmatmul.mubr.f32.gmra.mxu0 %v131
    %v201 = vpop.f32.mrf.mxu0
    %v202 = vadd.f32 0.0, %v201
    %v203 = vpop.f32.mrf.mxu0
    %204 = vdwg.mxu0
    %206 = vrot.lane.b32.xlu0 %v125, 96
    %v207 = vpop.permute.xlu0 %206
    %v208 = vsel %vm46, %v125, 0
    %v210 = vsel %vm46, %v207, 0
    %212 = vmatprep.subr.mxu0 0.0
    %213 = vmatpush1.xpose.msra.mxu0 0.0
    %214 = vmatprep.subr.mxu0 0.0
    %215 = vmatpush1.xpose.msra.mxu0 0.0
    %216 = vmatprep.subr.mxu0 0.0
    %217 = vmatpush1.xpose.msra.mxu0 0.0
    %218 = vmatprep.subr.mxu0 0.0
    %219 = vmatpush1.xpose.msra.mxu0 0.0
    %220 = vmatprep.subr.mxu0 0.0
    %221 = vmatpush1.xpose.msra.mxu0 0.0
    %222 = vmatprep.subr.mxu0 0.0
    %223 = vmatpush1.xpose.msra.mxu0 0.0
    %224 = vmatprep.subr.mxu0 0.0
    %225 = vmatpush1.xpose.msra.mxu0 0.0
    %226 = vmatprep.subr.mxu0 0.0
    %227 = vmatpush1.xpose.msra.mxu0 0.0
    %228 = vmatprep.subr.mxu0 0.0
    %229 = vmatpush1.xpose.msra.mxu0 0.0
    %230 = vmatprep.subr.mxu0 0.0
    %231 = vmatpush1.xpose.msra.mxu0 0.0
    %232 = vmatprep.subr.mxu0 0.0
    %233 = vmatpush1.xpose.msra.mxu0 0.0
    %234 = vmatprep.subr.mxu0 0.0
    %235 = vmatpush1.xpose.msra.mxu0 0.0
    %236 = vmatprep.subr.mxu0 0.0
    %237 = vmatpush1.xpose.msra.mxu0 0.0
    %238 = vmatprep.subr.mxu0 0.0
    %239 = vmatpush1.xpose.msra.mxu0 0.0
    %240 = vmatprep.subr.mxu0 0.0
    %241 = vmatpush1.xpose.msra.mxu0 0.0
    %242 = vmatprep.subr.mxu0 0.0
    %243 = vmatpush1.xpose.msra.mxu0 %v210
    %244 = vmatprep.subr.mxu0 0.0
    %245 = vmatpush2.xpose.msra.mxu0 0.0
    %246 = vmatprep.subr.mxu0 0.0
    %247 = vmatpush2.xpose.msra.mxu0 0.0
    %248 = vmatprep.subr.mxu0 0.0
    %249 = vmatpush2.xpose.msra.mxu0 0.0
    %250 = vmatprep.subr.mxu0 0.0
    %251 = vmatpush2.xpose.msra.mxu0 0.0
    %252 = vmatprep.subr.mxu0 0.0
    %253 = vmatpush2.xpose.msra.mxu0 0.0
    %254 = vmatprep.subr.mxu0 0.0
    %255 = vmatpush2.xpose.msra.mxu0 0.0
    %256 = vmatprep.subr.mxu0 0.0
    %257 = vmatpush2.xpose.msra.mxu0 0.0
    %258 = vmatprep.subr.mxu0 0.0
    %259 = vmatpush2.xpose.msra.mxu0 0.0
    %260 = vmatprep.subr.mxu0 0.0
    %261 = vmatpush2.xpose.msra.mxu0 0.0
    %262 = vmatprep.subr.mxu0 0.0
    %263 = vmatpush2.xpose.msra.mxu0 0.0
    %264 = vmatprep.subr.mxu0 0.0
    %265 = vmatpush2.xpose.msra.mxu0 0.0
    %266 = vmatprep.subr.mxu0 0.0
    %267 = vmatpush2.xpose.msra.mxu0 0.0
    %268 = vmatprep.subr.mxu0 0.0
    %269 = vmatpush2.xpose.msra.mxu0 0.0
    %270 = vmatprep.subr.mxu0 0.0
    %271 = vmatpush2.xpose.msra.mxu0 0.0
    %272 = vmatprep.subr.mxu0 0.0
    %273 = vmatpush2.xpose.msra.mxu0 0.0
    %274 = vmatprep.subr.mxu0 0.0
    %275 = vmatpush2.xpose.msra.mxu0 0.0
    %276 = vmatprep.mubr.f32.mxu0 0.0
    %277 = vmatmul.mubr.f32.gmra.mxu0 %v208
    %v278 = vpop.f32.mrf.mxu0
    %v279 = vadd.f32 0.0, %v278
    %v280 = vpop.f32.mrf.mxu0
    %281 = vdwg.mxu0
    %v282 = vmul.f32 %v202, 0.17677669
    %v283 = vmul.f32 %v279, 0.17677669
    %v284 = vmax.f32 %v282, -15.0
    %v285 = vmax.f32 %v283, -15.0
    %v286 = vmin.f32 %v284, 15.0
    %v287 = vmin.f32 %v285, 15.0
    %v288 = vlaneseq
    %v289 = vshrl.u32 %v288, 7
    %v290 = vlaneseq
    %v291 = vand.u32 %v290, 127
    %vm292 = vcmp.eq.s32.totalorder %v289, %v291
    %v293 = vsel %vm292, 1, 0
    %v294 = vcvt.s32.f32 %v293
    %v295 = vmul.f32 %v286, 1.442695
    %v296 = vpow.pop %v295
    %v297 = vmul.f32 %v287, 1.442695
    %v298 = vpow.pop %v297
    %v299 = vadd.f32 %v296, 1e-05
    %v300 = vadd.f32 %v298, 1e-05
    %vm301 = vcmp.eq.s32.totalorder %v293, 1
    %v302 = vsel %vm301, 0.0, %v299
    %v303 = vsel %vm301, 0.0, %v300
    %vm304 = vcmask 64512
    %v305 = vsel %vm304, %v302, 0.0
    %v306 = vrot.slane %v305, 4
    %v307 = vadd.f32 %v305, %v306
    %v308 = vrot.slane %v307, 2
    %v309 = vadd.f32 %v307, %v308
    %v310 = vrot.slane %v309, 1
    %v311 = vadd.f32 %v309, %v310
    %v312 = vsel %vm304, %v303, 0.0
    %v313 = vrot.slane %v312, 4
    %v314 = vadd.f32 %v312, %v313
    %v315 = vrot.slane %v314, 2
    %v316 = vadd.f32 %v314, %v315
    %v317 = vrot.slane %v316, 1
    %v318 = vadd.f32 %v316, %v317
    %v319 = vmul.f32 %v294, %v311
    %v320 = vmul.f32 %v294, %v318
    %v321 = vsub.f32 %v319, %v302
    %v322 = vsub.f32 %v320, %v303
    %v323 = vsel %vm301, %v296, 0.0
    %v324 = vsel %vm301, %v298, 0.0
    %v325 = vsel %vm304, %v323, 0.0
    %v326 = vrot.slane %v325, 4
    %v327 = vadd.f32 %v325, %v326
    %v328 = vrot.slane %v327, 2
    %v329 = vadd.f32 %v327, %v328
    %v330 = vrot.slane %v329, 1
    %v331 = vadd.f32 %v329, %v330
    %v332 = vsel %vm304, %v324, 0.0
    %v333 = vrot.slane %v332, 4
    %v334 = vadd.f32 %v332, %v333
    %v335 = vrot.slane %v334, 2
    %v336 = vadd.f32 %v334, %v335
    %v337 = vrot.slane %v336, 1
    %v338 = vadd.f32 %v336, %v337
    %339 = vadd.xlane.f32.xlu0 %v325
    %v340 = vpop.xlane.xlu0 %339
    %341 = vadd.xlane.f32.xlu0 %v332
    %v342 = vpop.xlane.xlu0 %341
    %vm343 = vcmp.eq.s32.totalorder %v289, 0
    %v344 = vsel %vm343, 1, 0
    %vm345 = vcmp.eq.s32.totalorder %v344, 1
    %v346 = vsel %vm345, %v331, %v321
    %v347 = vsel %vm345, %v338, %v322
    %349 = vrot.lane.b32.xlu0 %v294, 8
    %v350 = vpop.permute.xlu0 %349
    %v352 = vsel %vm304, %v346, %v350
    %v353 = vsel %vm304, %v347, %v350
    %v354 = vand.u32 2147483647, %v352
    %v355 = vand.u32 2147483647, %v353
    %vm356 = vcmp.lt.f32.partialorder %v354, 1e-30
    %vm357 = vcmp.lt.f32.partialorder %v355, 1e-30
    %vm358 = vcmp.lt.f32.partialorder %v352, 0.0
    %vm359 = vcmp.lt.f32.partialorder %v353, 0.0
    %v360 = vsel %vm358, -1e-30, 1e-30
    %v361 = vsel %vm359, -1e-30, 1e-30
    %v362 = vsel %vm356, %v360, %v352
    %v363 = vsel %vm357, %v361, %v353
    %v364 = vrcp.pop %v362
    %v365 = vmul.f32 1.0, %v364
    %v366 = vrcp.pop %v363
    %v367 = vmul.f32 1.0, %v366
    %369 = vset.pattern.permute.xlu0 0
    %370 = vperm.xlu0 %369, %v365
    %v371 = vpop.permute.xlu0 %370
    %374 = vset.pattern.permute.xlu0 0
    %375 = vperm.xlu0 %374, %v367
    %v376 = vpop.permute.xlu0 %375
    %v378 = vmul.f32 %v352, %v371
    %v379 = vmul.f32 %v353, %v376
    %v380 = vsub.f32 %v362, 1.0
    %v381 = vsub.f32 %v363, 1.0
    %v382 = vlaneseq
    %v383 = vshrl.u32 %v382, 7
    %v384 = vsub.s32 0, %v383
    %v385 = vrot.slane %v380, %v384
    %v386 = vlaneseq
    %v387 = vshrl.u32 %v386, 7
    %v388 = vsub.s32 0, %v387
    %v389 = vrot.slane %v381, %v388
    %v390 = vsel %vm345, %v385, %v352
    %v391 = vsel %vm345, %v389, %v353
    %393 = vset.pattern.permute.xlu0 0
    %394 = vperm.xlu0 %393, %v390
    %v395 = vpop.permute.xlu0 %394
    %398 = vset.pattern.permute.xlu0 0
    %399 = vperm.xlu0 %398, %v391
    %v400 = vpop.permute.xlu0 %399
    %v402 = vlaneseq
    %v403 = vshrl.u32 %v402, 7
    %v404 = vsub.s32 0, %v403
    %v405 = vrot.slane %v378, %v404
    %v406 = vlaneseq
    %v407 = vshrl.u32 %v406, 7
    %v408 = vsub.s32 0, %v407
    %v409 = vrot.slane %v379, %v408
    %v410 = vmul.f32 %v395, %v405
    %v411 = vmul.f32 %v400, %v409
    %v412 = vsub.f32 %v352, %v410
    %v413 = vsub.f32 %v353, %v411
    %v414 = vand.u32 2147483647, %v412
    %v415 = vand.u32 2147483647, %v413
    %vm416 = vcmp.lt.f32.partialorder %v414, 1e-30
    %vm417 = vcmp.lt.f32.partialorder %v415, 1e-30
    %vm418 = vcmp.lt.f32.partialorder %v412, 0.0
    %vm419 = vcmp.lt.f32.partialorder %v413, 0.0
    %v420 = vsel %vm418, -1e-30, 1e-30
    %v421 = vsel %vm419, -1e-30, 1e-30
    %v422 = vsel %vm416, %v420, %v412
    %v423 = vsel %vm417, %v421, %v413
    %v424 = vrcp.pop %v422
    %v425 = vmul.f32 1.0, %v424
    %v426 = vrcp.pop %v423
    %v427 = vmul.f32 1.0, %v426
    %429 = vset.pattern.permute.xlu0 1
    %430 = vperm.xlu0 %429, %v425
    %v431 = vpop.permute.xlu0 %430
    %434 = vset.pattern.permute.xlu0 1
    %435 = vperm.xlu0 %434, %v427
    %v436 = vpop.permute.xlu0 %435
    %v438 = vmul.f32 %v412, %v431
    %v439 = vmul.f32 %v413, %v436
    %vm440 = vcmp.eq.s32.totalorder %v289, 1
    %v441 = vsub.f32 %v422, 1.0
    %v442 = vsub.f32 %v423, 1.0
    %v443 = vsel %vm440, 1, 0
    %vm444 = vcmp.eq.s32.totalorder %v443, 1
    %v445 = vlaneseq
    %v446 = vshrl.u32 %v445, 7
    %v447 = vsub.s32 1, %v446
    %v448 = vrot.slane %v441, %v447
    %v449 = vlaneseq
    %v450 = vshrl.u32 %v449, 7
    %v451 = vsub.s32 1, %v450
    %v452 = vrot.slane %v442, %v451
    %v453 = vsel %vm444, %v448, %v412
    %v454 = vsel %vm444, %v452, %v413
    %456 = vset.pattern.permute.xlu0 1
    %457 = vperm.xlu0 %456, %v453
    %v458 = vpop.permute.xlu0 %457
    %461 = vset.pattern.permute.xlu0 1
    %462 = vperm.xlu0 %461, %v454
    %v463 = vpop.permute.xlu0 %462
    %v465 = vlaneseq
    %v466 = vshrl.u32 %v465, 7
    %v467 = vsub.s32 1, %v466
    %v468 = vrot.slane %v438, %v467
    %v469 = vlaneseq
    %v470 = vshrl.u32 %v469, 7
    %v471 = vsub.s32 1, %v470
    %v472 = vrot.slane %v439, %v471
    %v473 = vmul.f32 %v458, %v468
    %v474 = vmul.f32 %v463, %v472
    %v475 = vsub.f32 %v412, %v473
    %v476 = vsub.f32 %v413, %v474
    %v477 = vand.u32 2147483647, %v475
    %v478 = vand.u32 2147483647, %v476
    %vm479 = vcmp.lt.f32.partialorder %v477, 1e-30
    %vm480 = vcmp.lt.f32.partialorder %v478, 1e-30
    %vm481 = vcmp.lt.f32.partialorder %v475, 0.0
    %vm482 = vcmp.lt.f32.partialorder %v476, 0.0
    %v483 = vsel %vm481, -1e-30, 1e-30
    %v484 = vsel %vm482, -1e-30, 1e-30
    %v485 = vsel %vm479, %v483, %v475
    %v486 = vsel %vm480, %v484, %v476
    %v487 = vrcp.pop %v485
    %v488 = vmul.f32 1.0, %v487
    %v489 = vrcp.pop %v486
    %v490 = vmul.f32 1.0, %v489
    %492 = vset.pattern.permute.xlu0 2
    %493 = vperm.xlu0 %492, %v488
    %v494 = vpop.permute.xlu0 %493
    %497 = vset.pattern.permute.xlu0 2
    %498 = vperm.xlu0 %497, %v490
    %v499 = vpop.permute.xlu0 %498
    %v501 = vmul.f32 %v475, %v494
    %v502 = vmul.f32 %v476, %v499
    %vm503 = vcmp.eq.s32.totalorder %v289, 2
    %v504 = vsub.f32 %v485, 1.0
    %v505 = vsub.f32 %v486, 1.0
    %v506 = vsel %vm503, 1, 0
    %vm507 = vcmp.eq.s32.totalorder %v506, 1
    %v508 = vlaneseq
    %v509 = vshrl.u32 %v508, 7
    %v510 = vsub.s32 2, %v509
    %v511 = vrot.slane %v504, %v510
    %v512 = vlaneseq
    %v513 = vshrl.u32 %v512, 7
    %v514 = vsub.s32 2, %v513
    %v515 = vrot.slane %v505, %v514
    %v516 = vsel %vm507, %v511, %v475
    %v517 = vsel %vm507, %v515, %v476
    %519 = vset.pattern.permute.xlu0 2
    %520 = vperm.xlu0 %519, %v516
    %v521 = vpop.permute.xlu0 %520
    %524 = vset.pattern.permute.xlu0 2
    %525 = vperm.xlu0 %524, %v517
    %v526 = vpop.permute.xlu0 %525
    %v528 = vlaneseq
    %v529 = vshrl.u32 %v528, 7
    %v530 = vsub.s32 2, %v529
    %v531 = vrot.slane %v501, %v530
    %v532 = vlaneseq
    %v533 = vshrl.u32 %v532, 7
    %v534 = vsub.s32 2, %v533
    %v535 = vrot.slane %v502, %v534
    %v536 = vmul.f32 %v521, %v531
    %v537 = vmul.f32 %v526, %v535
    %v538 = vsub.f32 %v475, %v536
    %v539 = vsub.f32 %v476, %v537
    %v540 = vand.u32 2147483647, %v538
    %v541 = vand.u32 2147483647, %v539
    %vm542 = vcmp.lt.f32.partialorder %v540, 1e-30
    %vm543 = vcmp.lt.f32.partialorder %v541, 1e-30
    %vm544 = vcmp.lt.f32.partialorder %v538, 0.0
    %vm545 = vcmp.lt.f32.partialorder %v539, 0.0
    %v546 = vsel %vm544, -1e-30, 1e-30
    %v547 = vsel %vm545, -1e-30, 1e-30
    %v548 = vsel %vm542, %v546, %v538
    %v549 = vsel %vm543, %v547, %v539
    %v550 = vrcp.pop %v548
    %v551 = vmul.f32 1.0, %v550
    %v552 = vrcp.pop %v549
    %v553 = vmul.f32 1.0, %v552
    %555 = vset.pattern.permute.xlu0 3
    %556 = vperm.xlu0 %555, %v551
    %v557 = vpop.permute.xlu0 %556
    %560 = vset.pattern.permute.xlu0 3
    %561 = vperm.xlu0 %560, %v553
    %v562 = vpop.permute.xlu0 %561
    %v564 = vmul.f32 %v538, %v557
    %v565 = vmul.f32 %v539, %v562
    %vm566 = vcmp.eq.s32.totalorder %v289, 3
    %v567 = vsub.f32 %v548, 1.0
    %v568 = vsub.f32 %v549, 1.0
    %v569 = vsel %vm566, 1, 0
    %vm570 = vcmp.eq.s32.totalorder %v569, 1
    %v571 = vlaneseq
    %v572 = vshrl.u32 %v571, 7
    %v573 = vsub.s32 3, %v572
    %v574 = vrot.slane %v567, %v573
    %v575 = vlaneseq
    %v576 = vshrl.u32 %v575, 7
    %v577 = vsub.s32 3, %v576
    %v578 = vrot.slane %v568, %v577
    %v579 = vsel %vm570, %v574, %v538
    %v580 = vsel %vm570, %v578, %v539
    %582 = vset.pattern.permute.xlu0 3
    %583 = vperm.xlu0 %582, %v579
    %v584 = vpop.permute.xlu0 %583
    %587 = vset.pattern.permute.xlu0 3
    %588 = vperm.xlu0 %587, %v580
    %v589 = vpop.permute.xlu0 %588
    %v591 = vlaneseq
    %v592 = vshrl.u32 %v591, 7
    %v593 = vsub.s32 3, %v592
    %v594 = vrot.slane %v564, %v593
    %v595 = vlaneseq
    %v596 = vshrl.u32 %v595, 7
    %v597 = vsub.s32 3, %v596
    %v598 = vrot.slane %v565, %v597
    %v599 = vmul.f32 %v584, %v594
    %v600 = vmul.f32 %v589, %v598
    %v601 = vsub.f32 %v538, %v599
    %v602 = vsub.f32 %v539, %v600
    %v603 = vand.u32 2147483647, %v601
    %v604 = vand.u32 2147483647, %v602
    %vm605 = vcmp.lt.f32.partialorder %v603, 1e-30
    %vm606 = vcmp.lt.f32.partialorder %v604, 1e-30
    %vm607 = vcmp.lt.f32.partialorder %v601, 0.0
    %vm608 = vcmp.lt.f32.partialorder %v602, 0.0
    %v609 = vsel %vm607, -1e-30, 1e-30
    %v610 = vsel %vm608, -1e-30, 1e-30
    %v611 = vsel %vm605, %v609, %v601
    %v612 = vsel %vm606, %v610, %v602
    %v613 = vrcp.pop %v611
    %v614 = vmul.f32 1.0, %v613
    %v615 = vrcp.pop %v612
    %v616 = vmul.f32 1.0, %v615
    %618 = vset.pattern.permute.xlu0 4
    %619 = vperm.xlu0 %618, %v614
    %v620 = vpop.permute.xlu0 %619
    %623 = vset.pattern.permute.xlu0 4
    %624 = vperm.xlu0 %623, %v616
    %v625 = vpop.permute.xlu0 %624
    %v627 = vmul.f32 %v601, %v620
    %v628 = vmul.f32 %v602, %v625
    %vm629 = vcmp.eq.s32.totalorder %v289, 4
    %v630 = vsub.f32 %v611, 1.0
    %v631 = vsub.f32 %v612, 1.0
    %v632 = vsel %vm629, 1, 0
    %vm633 = vcmp.eq.s32.totalorder %v632, 1
    %v634 = vlaneseq
    %v635 = vshrl.u32 %v634, 7
    %v636 = vsub.s32 4, %v635
    %v637 = vrot.slane %v630, %v636
    %v638 = vlaneseq
    %v639 = vshrl.u32 %v638, 7
    %v640 = vsub.s32 4, %v639
    %v641 = vrot.slane %v631, %v640
    %v642 = vsel %vm633, %v637, %v601
    %v643 = vsel %vm633, %v641, %v602
    %645 = vset.pattern.permute.xlu0 4
    %646 = vperm.xlu0 %645, %v642
    %v647 = vpop.permute.xlu0 %646
    %650 = vset.pattern.permute.xlu0 4
    %651 = vperm.xlu0 %650, %v643
    %v652 = vpop.permute.xlu0 %651
    %v654 = vlaneseq
    %v655 = vshrl.u32 %v654, 7
    %v656 = vsub.s32 4, %v655
    %v657 = vrot.slane %v627, %v656
    %v658 = vlaneseq
    %v659 = vshrl.u32 %v658, 7
    %v660 = vsub.s32 4, %v659
    %v661 = vrot.slane %v628, %v660
    %v662 = vmul.f32 %v647, %v657
    %v663 = vmul.f32 %v652, %v661
    %v664 = vsub.f32 %v601, %v662
    %v665 = vsub.f32 %v602, %v663
    %v666 = vand.u32 2147483647, %v664
    %v667 = vand.u32 2147483647, %v665
    %vm668 = vcmp.lt.f32.partialorder %v666, 1e-30
    %vm669 = vcmp.lt.f32.partialorder %v667, 1e-30
    %vm670 = vcmp.lt.f32.partialorder %v664, 0.0
    %vm671 = vcmp.lt.f32.partialorder %v665, 0.0
    %v672 = vsel %vm670, -1e-30, 1e-30
    %v673 = vsel %vm671, -1e-30, 1e-30
    %v674 = vsel %vm668, %v672, %v664
    %v675 = vsel %vm669, %v673, %v665
    %v676 = vrcp.pop %v674
    %v677 = vmul.f32 1.0, %v676
    %v678 = vrcp.pop %v675
    %v679 = vmul.f32 1.0, %v678
    %681 = vset.pattern.permute.xlu0 5
    %682 = vperm.xlu0 %681, %v677
    %v683 = vpop.permute.xlu0 %682
    %686 = vset.pattern.permute.xlu0 5
    %687 = vperm.xlu0 %686, %v679
    %v688 = vpop.permute.xlu0 %687
    %v690 = vmul.f32 %v664, %v683
    %v691 = vmul.f32 %v665, %v688
    %vm692 = vcmp.eq.s32.totalorder %v289, 5
    %v693 = vsub.f32 %v674, 1.0
    %v694 = vsub.f32 %v675, 1.0
    %v695 = vsel %vm692, 1, 0
    %vm696 = vcmp.eq.s32.totalorder %v695, 1
    %v697 = vlaneseq
    %v698 = vshrl.u32 %v697, 7
    %v699 = vsub.s32 5, %v698
    %v700 = vrot.slane %v693, %v699
    %v701 = vlaneseq
    %v702 = vshrl.u32 %v701, 7
    %v703 = vsub.s32 5, %v702
    %v704 = vrot.slane %v694, %v703
    %v705 = vsel %vm696, %v700, %v664
    %v706 = vsel %vm696, %v704, %v665
    %708 = vset.pattern.permute.xlu0 5
    %709 = vperm.xlu0 %708, %v705
    %v710 = vpop.permute.xlu0 %709
    %713 = vset.pattern.permute.xlu0 5
    %714 = vperm.xlu0 %713, %v706
    %v715 = vpop.permute.xlu0 %714
    %v717 = vlaneseq
    %v718 = vshrl.u32 %v717, 7
    %v719 = vsub.s32 5, %v718
    %v720 = vrot.slane %v690, %v719
    %v721 = vlaneseq
    %v722 = vshrl.u32 %v721, 7
    %v723 = vsub.s32 5, %v722
    %v724 = vrot.slane %v691, %v723
    %v725 = vmul.f32 %v710, %v720
    %v726 = vmul.f32 %v715, %v724
    %v727 = vsub.f32 %v664, %v725
    %v728 = vsub.f32 %v665, %v726
    %v729 = vand.u32 2147483647, %v727
    %v730 = vand.u32 2147483647, %v728
    %vm731 = vcmp.lt.f32.partialorder %v729, 1e-30
    %vm732 = vcmp.lt.f32.partialorder %v730, 1e-30
    %vm733 = vcmp.lt.f32.partialorder %v727, 0.0
    %vm734 = vcmp.lt.f32.partialorder %v728, 0.0
    %v735 = vsel %vm733, -1e-30, 1e-30
    %v736 = vsel %vm734, -1e-30, 1e-30
    %v737 = vsel %vm731, %v735, %v727
    %v738 = vsel %vm732, %v736, %v728
    %v739 = vrcp.pop %v737
    %v740 = vmul.f32 1.0, %v739
    %v741 = vrcp.pop %v738
    %v742 = vmul.f32 1.0, %v741
    %744 = vset.pattern.permute.xlu0 6
    %745 = vperm.xlu0 %744, %v740
    %v746 = vpop.permute.xlu0 %745
    %749 = vset.pattern.permute.xlu0 6
    %750 = vperm.xlu0 %749, %v742
    %v751 = vpop.permute.xlu0 %750
    %v753 = vmul.f32 %v727, %v746
    %v754 = vmul.f32 %v728, %v751
    %vm755 = vcmp.eq.s32.totalorder %v289, 6
    %v756 = vsub.f32 %v737, 1.0
    %v757 = vsub.f32 %v738, 1.0
    %v758 = vsel %vm755, 1, 0
    %vm759 = vcmp.eq.s32.totalorder %v758, 1
    %v760 = vlaneseq
    %v761 = vshrl.u32 %v760, 7
    %v762 = vsub.s32 6, %v761
    %v763 = vrot.slane %v756, %v762
    %v764 = vlaneseq
    %v765 = vshrl.u32 %v764, 7
    %v766 = vsub.s32 6, %v765
    %v767 = vrot.slane %v757, %v766
    %v768 = vsel %vm759, %v763, %v727
    %v769 = vsel %vm759, %v767, %v728
    %771 = vset.pattern.permute.xlu0 6
    %772 = vperm.xlu0 %771, %v768
    %v773 = vpop.permute.xlu0 %772
    %776 = vset.pattern.permute.xlu0 6
    %777 = vperm.xlu0 %776, %v769
    %v778 = vpop.permute.xlu0 %777
    %v780 = vlaneseq
    %v781 = vshrl.u32 %v780, 7
    %v782 = vsub.s32 6, %v781
    %v783 = vrot.slane %v753, %v782
    %v784 = vlaneseq
    %v785 = vshrl.u32 %v784, 7
    %v786 = vsub.s32 6, %v785
    %v787 = vrot.slane %v754, %v786
    %v788 = vmul.f32 %v773, %v783
    %v789 = vmul.f32 %v778, %v787
    %v790 = vsub.f32 %v727, %v788
    %v791 = vsub.f32 %v728, %v789
    %v792 = vand.u32 2147483647, %v790
    %v793 = vand.u32 2147483647, %v791
    %vm794 = vcmp.lt.f32.partialorder %v792, 1e-30
    %vm795 = vcmp.lt.f32.partialorder %v793, 1e-30
    %vm796 = vcmp.lt.f32.partialorder %v790, 0.0
    %vm797 = vcmp.lt.f32.partialorder %v791, 0.0
    %v798 = vsel %vm796, -1e-30, 1e-30
    %v799 = vsel %vm797, -1e-30, 1e-30
    %v800 = vsel %vm794, %v798, %v790
    %v801 = vsel %vm795, %v799, %v791
    %v802 = vrcp.pop %v800
    %v803 = vmul.f32 1.0, %v802
    %v804 = vrcp.pop %v801
    %v805 = vmul.f32 1.0, %v804
    %807 = vset.pattern.permute.xlu0 7
    %808 = vperm.xlu0 %807, %v803
    %v809 = vpop.permute.xlu0 %808
    %812 = vset.pattern.permute.xlu0 7
    %813 = vperm.xlu0 %812, %v805
    %v814 = vpop.permute.xlu0 %813
    %v816 = vmul.f32 %v790, %v809
    %v817 = vmul.f32 %v791, %v814
    %vm818 = vcmp.eq.s32.totalorder %v289, 7
    %v819 = vsub.f32 %v800, 1.0
    %v820 = vsub.f32 %v801, 1.0
    %v821 = vsel %vm818, 1, 0
    %vm822 = vcmp.eq.s32.totalorder %v821, 1
    %v823 = vlaneseq
    %v824 = vshrl.u32 %v823, 7
    %v825 = vsub.s32 7, %v824
    %v826 = vrot.slane %v819, %v825
    %v827 = vlaneseq
    %v828 = vshrl.u32 %v827, 7
    %v829 = vsub.s32 7, %v828
    %v830 = vrot.slane %v820, %v829
    %v831 = vsel %vm822, %v826, %v790
    %v832 = vsel %vm822, %v830, %v791
    %834 = vset.pattern.permute.xlu0 7
    %835 = vperm.xlu0 %834, %v831
    %v836 = vpop.permute.xlu0 %835
    %839 = vset.pattern.permute.xlu0 7
    %840 = vperm.xlu0 %839, %v832
    %v841 = vpop.permute.xlu0 %840
    %v843 = vlaneseq
    %v844 = vshrl.u32 %v843, 7
    %v845 = vsub.s32 7, %v844
    %v846 = vrot.slane %v816, %v845
    %v847 = vlaneseq
    %v848 = vshrl.u32 %v847, 7
    %v849 = vsub.s32 7, %v848
    %v850 = vrot.slane %v817, %v849
    %v851 = vmul.f32 %v836, %v846
    %v852 = vmul.f32 %v841, %v850
    %v853 = vsub.f32 %v790, %v851
    %v854 = vsub.f32 %v791, %v852
    %855 = vxpose.xlu0.b32.start [1/16] %v296, 128
    %856 = vxpose.xlu0.b32.cont [2/16] 0.0, 128
    %857 = vxpose.xlu0.b32.cont [3/16] 0.0, 128
    %858 = vxpose.xlu0.b32.cont [4/16] 0.0, 128
    %859 = vxpose.xlu0.b32.cont [5/16] 0.0, 128
    %860 = vxpose.xlu0.b32.cont [6/16] 0.0, 128
    %861 = vxpose.xlu0.b32.cont [7/16] 0.0, 128
    %862 = vxpose.xlu0.b32.cont [8/16] 0.0, 128
    %863 = vxpose.xlu0.b32.cont [9/16] 0.0, 128
    %864 = vxpose.xlu0.b32.cont [10/16] 0.0, 128
    %865 = vxpose.xlu0.b32.cont [11/16] 0.0, 128
    %866 = vxpose.xlu0.b32.cont [12/16] 0.0, 128
    %867 = vxpose.xlu0.b32.cont [13/16] 0.0, 128
    %868 = vxpose.xlu0.b32.cont [14/16] 0.0, 128
    %869 = vxpose.xlu0.b32.cont [15/16] 0.0, 128
    %870 = vxpose.xlu0.b32.end [16/16] 0.0, 128
    %v871 = vpop.trf.xlu0
    %v872 = vpop.trf.xlu0
    %v873 = vpop.trf.xlu0
    %v874 = vpop.trf.xlu0
    %v875 = vpop.trf.xlu0
    %v876 = vpop.trf.xlu0
    %v877 = vpop.trf.xlu0
    %v878 = vpop.trf.xlu0
    %v879 = vpop.trf.xlu0
    %v880 = vpop.trf.xlu0
    %v881 = vpop.trf.xlu0
    %v882 = vpop.trf.xlu0
    %v883 = vpop.trf.xlu0
    %v884 = vpop.trf.xlu0
    %v885 = vpop.trf.xlu0
    %v886 = vpop.trf.xlu0
    %887 = vxpose.xlu0.b32.start [1/16] %v298, 128
    %888 = vxpose.xlu0.b32.cont [2/16] 0.0, 128
    %889 = vxpose.xlu0.b32.cont [3/16] 0.0, 128
    %890 = vxpose.xlu0.b32.cont [4/16] 0.0, 128
    %891 = vxpose.xlu0.b32.cont [5/16] 0.0, 128
    %892 = vxpose.xlu0.b32.cont [6/16] 0.0, 128
    %893 = vxpose.xlu0.b32.cont [7/16] 0.0, 128
    %894 = vxpose.xlu0.b32.cont [8/16] 0.0, 128
    %895 = vxpose.xlu0.b32.cont [9/16] 0.0, 128
    %896 = vxpose.xlu0.b32.cont [10/16] 0.0, 128
    %897 = vxpose.xlu0.b32.cont [11/16] 0.0, 128
    %898 = vxpose.xlu0.b32.cont [12/16] 0.0, 128
    %899 = vxpose.xlu0.b32.cont [13/16] 0.0, 128
    %900 = vxpose.xlu0.b32.cont [14/16] 0.0, 128
    %901 = vxpose.xlu0.b32.cont [15/16] 0.0, 128
    %902 = vxpose.xlu0.b32.end [16/16] 0.0, 128
    %v903 = vpop.trf.xlu0
    %v904 = vpop.trf.xlu0
    %v905 = vpop.trf.xlu0
    %v906 = vpop.trf.xlu0
    %v907 = vpop.trf.xlu0
    %v908 = vpop.trf.xlu0
    %v909 = vpop.trf.xlu0
    %v910 = vpop.trf.xlu0
    %v911 = vpop.trf.xlu0
    %v912 = vpop.trf.xlu0
    %v913 = vpop.trf.xlu0
    %v914 = vpop.trf.xlu0
    %v915 = vpop.trf.xlu0
    %v916 = vpop.trf.xlu0
    %v917 = vpop.trf.xlu0
    %v918 = vpop.trf.xlu0
    %921 = vrot.lane.b32.xlu0 %v853, 120
    %v922 = vpop.permute.xlu0 %921
    %923 = vrot.lane.b32.xlu0 %v854, 120
    %v924 = vpop.permute.xlu0 %923
    %v927 = vsel %vm301, %v922, 0.0
    %v928 = vsel %vm301, %v924, 0.0
    %v929 = vsel %vm304, %v927, 0.0
    %930 = vadd.xlane.f32.xlu0 %v929
    %v931 = vpop.xlane.xlu0 %930
    %v932 = vsel %vm304, %v928, 0.0
    %933 = vadd.xlane.f32.xlu0 %v932
    %v934 = vpop.xlane.xlu0 %933
    %v935 = vmul.f32 %v871, %v931
    %v936 = vmul.f32 %v903, %v934
    %v937 = vsel %vm345, 0.0, %v935
    %v938 = vsel %vm345, 0.0, %v936
    %vm939 = vcmp.eq.s32.totalorder %v291, 0
    %v940 = vmul.f32 %v871, %v922
    %v941 = vmul.f32 %v903, %v924
    %v942 = vsel %vm939, 1, 0
    %vm943 = vcmp.eq.s32.totalorder %v942, 1
    %v944 = vsel %vm943, 0.0, %v940
    %v945 = vsel %vm943, 0.0, %v941
    %v946 = vmul.f32 %v340, %v853
    %v947 = vmul.f32 %v342, %v854
    %v948 = vsub.f32 %v937, %v944
    %v949 = vsub.f32 %v938, %v945
    %951 = vset.pattern.permute.xlu0 8
    %952 = vperm.xlu0 %951, %v946
    %v953 = vpop.permute.xlu0 %952
    %956 = vset.pattern.permute.xlu0 8
    %957 = vperm.xlu0 %956, %v947
    %v958 = vpop.permute.xlu0 %957
    %v960 = vmul.f32 %v294, %v953
    %v961 = vmul.f32 %v294, %v958
    %v962 = vadd.f32 %v948, %v960
    %v963 = vadd.f32 %v949, %v961
    %964 = vrot.lane.b32.xlu0 %v120, 64
    %v965 = vpop.permute.xlu0 %964
    %v968 = vsel %vm304, %v962, 0
    %970 = vmatprep.subr.mxu0 0.0
    %971 = vmatpush1.msra.mxu0 0.0
    %972 = vmatprep.subr.mxu0 0.0
    %973 = vmatpush1.msra.mxu0 0.0
    %974 = vmatprep.subr.mxu0 0.0
    %975 = vmatpush1.msra.mxu0 0.0
    %976 = vmatprep.subr.mxu0 0.0
    %977 = vmatpush1.msra.mxu0 0.0
    %978 = vmatprep.subr.mxu0 0.0
    %979 = vmatpush1.msra.mxu0 0.0
    %980 = vmatprep.subr.mxu0 0.0
    %981 = vmatpush1.msra.mxu0 0.0
    %982 = vmatprep.subr.mxu0 0.0
    %983 = vmatpush1.msra.mxu0 0.0
    %984 = vmatprep.subr.mxu0 0.0
    %985 = vmatpush1.msra.mxu0 0.0
    %986 = vmatprep.subr.mxu0 0.0
    %987 = vmatpush1.msra.mxu0 0.0
    %988 = vmatprep.subr.mxu0 0.0
    %989 = vmatpush1.msra.mxu0 0.0
    %990 = vmatprep.subr.mxu0 0.0
    %991 = vmatpush1.msra.mxu0 0.0
    %992 = vmatprep.subr.mxu0 0.0
    %993 = vmatpush1.msra.mxu0 0.0
    %994 = vmatprep.subr.mxu0 0.0
    %995 = vmatpush1.msra.mxu0 0.0
    %996 = vmatprep.subr.mxu0 0.0
    %997 = vmatpush1.msra.mxu0 0.0
    %998 = vmatprep.subr.mxu0 0.0
    %999 = vmatpush1.msra.mxu0 0.0
    %1000 = vmatprep.subr.mxu0 0.0
    %1001 = vmatpush1.msra.mxu0 %v965
    %1002 = vmatprep.subr.mxu0 0.0
    %1003 = vmatpush2.msra.mxu0 0.0
    %1004 = vmatprep.subr.mxu0 0.0
    %1005 = vmatpush2.msra.mxu0 0.0
    %1006 = vmatprep.subr.mxu0 0.0
    %1007 = vmatpush2.msra.mxu0 0.0
    %1008 = vmatprep.subr.mxu0 0.0
    %1009 = vmatpush2.msra.mxu0 0.0
    %1010 = vmatprep.subr.mxu0 0.0
    %1011 = vmatpush2.msra.mxu0 0.0
    %1012 = vmatprep.subr.mxu0 0.0
    %1013 = vmatpush2.msra.mxu0 0.0
    %1014 = vmatprep.subr.mxu0 0.0
    %1015 = vmatpush2.msra.mxu0 0.0
    %1016 = vmatprep.subr.mxu0 0.0
    %1017 = vmatpush2.msra.mxu0 0.0
    %1018 = vmatprep.subr.mxu0 0.0
    %1019 = vmatpush2.msra.mxu0 0.0
    %1020 = vmatprep.subr.mxu0 0.0
    %1021 = vmatpush2.msra.mxu0 0.0
    %1022 = vmatprep.subr.mxu0 0.0
    %1023 = vmatpush2.msra.mxu0 0.0
    %1024 = vmatprep.subr.mxu0 0.0
    %1025 = vmatpush2.msra.mxu0 0.0
    %1026 = vmatprep.subr.mxu0 0.0
    %1027 = vmatpush2.msra.mxu0 0.0
    %1028 = vmatprep.subr.mxu0 0.0
    %1029 = vmatpush2.msra.mxu0 0.0
    %1030 = vmatprep.subr.mxu0 0.0
    %1031 = vmatpush2.msra.mxu0 0.0
    %1032 = vmatprep.subr.mxu0 0.0
    %1033 = vmatpush2.msra.mxu0 0.0
    %1034 = vmatprep.mubr.f32.mxu0 0.0
    %1035 = vmatmul.mubr.f32.gmra.mxu0 %v968
    %v1036 = vpop.f32.mrf.mxu0
    %v1037 = vadd.f32 0.0, %v1036
    %v1038 = vpop.f32.mrf.mxu0
    %1039 = vdwg.mxu0
    %1040 = vrot.lane.b32.xlu0 %v125, 64
    %v1041 = vpop.permute.xlu0 %1040
    %v1044 = vsel %vm304, %v963, 0
    %1046 = vmatprep.subr.mxu0 0.0
    %1047 = vmatpush1.msra.mxu0 0.0
    %1048 = vmatprep.subr.mxu0 0.0
    %1049 = vmatpush1.msra.mxu0 0.0
    %1050 = vmatprep.subr.mxu0 0.0
    %1051 = vmatpush1.msra.mxu0 0.0
    %1052 = vmatprep.subr.mxu0 0.0
    %1053 = vmatpush1.msra.mxu0 0.0
    %1054 = vmatprep.subr.mxu0 0.0
    %1055 = vmatpush1.msra.mxu0 0.0
    %1056 = vmatprep.subr.mxu0 0.0
    %1057 = vmatpush1.msra.mxu0 0.0
    %1058 = vmatprep.subr.mxu0 0.0
    %1059 = vmatpush1.msra.mxu0 0.0
    %1060 = vmatprep.subr.mxu0 0.0
    %1061 = vmatpush1.msra.mxu0 0.0
    %1062 = vmatprep.subr.mxu0 0.0
    %1063 = vmatpush1.msra.mxu0 0.0
    %1064 = vmatprep.subr.mxu0 0.0
    %1065 = vmatpush1.msra.mxu0 0.0
    %1066 = vmatprep.subr.mxu0 0.0
    %1067 = vmatpush1.msra.mxu0 0.0
    %1068 = vmatprep.subr.mxu0 0.0
    %1069 = vmatpush1.msra.mxu0 0.0
    %1070 = vmatprep.subr.mxu0 0.0
    %1071 = vmatpush1.msra.mxu0 0.0
    %1072 = vmatprep.subr.mxu0 0.0
    %1073 = vmatpush1.msra.mxu0 0.0
    %1074 = vmatprep.subr.mxu0 0.0
    %1075 = vmatpush1.msra.mxu0 0.0
    %1076 = vmatprep.subr.mxu0 0.0
    %1077 = vmatpush1.msra.mxu0 %v1041
    %1078 = vmatprep.subr.mxu0 0.0
    %1079 = vmatpush2.msra.mxu0 0.0
    %1080 = vmatprep.subr.mxu0 0.0
    %1081 = vmatpush2.msra.mxu0 0.0
    %1082 = vmatprep.subr.mxu0 0.0
    %1083 = vmatpush2.msra.mxu0 0.0
    %1084 = vmatprep.subr.mxu0 0.0
    %1085 = vmatpush2.msra.mxu0 0.0
    %1086 = vmatprep.subr.mxu0 0.0
    %1087 = vmatpush2.msra.mxu0 0.0
    %1088 = vmatprep.subr.mxu0 0.0
    %1089 = vmatpush2.msra.mxu0 0.0
    %1090 = vmatprep.subr.mxu0 0.0
    %1091 = vmatpush2.msra.mxu0 0.0
    %1092 = vmatprep.subr.mxu0 0.0
    %1093 = vmatpush2.msra.mxu0 0.0
    %1094 = vmatprep.subr.mxu0 0.0
    %1095 = vmatpush2.msra.mxu0 0.0
    %1096 = vmatprep.subr.mxu0 0.0
    %1097 = vmatpush2.msra.mxu0 0.0
    %1098 = vmatprep.subr.mxu0 0.0
    %1099 = vmatpush2.msra.mxu0 0.0
    %1100 = vmatprep.subr.mxu0 0.0
    %1101 = vmatpush2.msra.mxu0 0.0
    %1102 = vmatprep.subr.mxu0 0.0
    %1103 = vmatpush2.msra.mxu0 0.0
    %1104 = vmatprep.subr.mxu0 0.0
    %1105 = vmatpush2.msra.mxu0 0.0
    %1106 = vmatprep.subr.mxu0 0.0
    %1107 = vmatpush2.msra.mxu0 0.0
    %1108 = vmatprep.subr.mxu0 0.0
    %1109 = vmatpush2.msra.mxu0 0.0
    %1110 = vmatprep.mubr.f32.mxu0 0.0
    %1111 = vmatmul.mubr.f32.gmra.mxu0 %v1044
    %v1112 = vpop.f32.mrf.mxu0
    %v1113 = vadd.f32 0.0, %v1112
    %v1114 = vpop.f32.mrf.mxu0
    %1115 = vdwg.mxu0
    %1116 = vst.msk [vmem:[#allocation7] sm:$0xff] %vm46, %v1037
    %1117 = vst.msk [vmem:[#allocation7 + $0x8] sm:$0xff] %vm46, %v1113
    // Predicated region
    $region18: #{tpu_custom_call.1} parent=1 // pred_check
      _
    $region19: #{tpu_custom_call.1} parent=1 // pred_check_branch
      %1119 = sbr.rel (0) target = $region21
    $region20: #{tpu_custom_call.1} parent=1 // pred_region
      %s1121 = ssub.s32 256, 256
      %1122 = vsyncadd [#allocation4], %s1121
      %s1123 = sshll.u32 [#allocation7], 4
      %s1124 = int_to_ptr.vmem [resolvable:$true] %s1123
      %1129 = dma.vmem_to_hbm [thread:$0]  %s1124, 256, %s2, [#allocation4], 128, 128, 8
    $region21: #{tpu_custom_call.1} parent=1 // pred_fallthru
      _
    // Predicated region
    $region22: #{tpu_custom_call.1} parent=1 // pred_check
      _
    $region23: #{tpu_custom_call.1} parent=1 // pred_check_branch
      %1131 = sbr.rel (0) target = $region25
    $region24: #{tpu_custom_call.1} parent=1 // pred_region
      %1132 = dma.done [#allocation4], 256
    $region25: #{tpu_custom_call.1} parent=1 // pred_fallthru
      _
    %1133 = vsyncpa [#allocation3], 1
    %1134 = vsyncpa [#allocation6], 1
    %1135 = vsyncpa [#allocation4], 1

</llo_original>
